<compile_context>
chip_gen: v7x
topology: tpu7x:2x2x1
jax: 0.10.0
libtpu: 0.0.40
codegen_flags: <defaults>
</compile_context>

<pallas_src>
import jax
import jax.numpy as jnp
from jax.experimental import pallas as pl
from jax.experimental.pallas import tpu as pltpu


def _round_up(x: int, m: int) -> int:
    return ((x + m - 1) // m) * m


def _cdiv(a: int, b: int) -> int:
    return -(-a // b)


def _vmem_budgets():
    """Generation-aware VMEM sizing.

    v5e/v6e have 128 MiB of VMEM per TensorCore, v7x only 64 MiB.  Leave
    ~16 MiB of headroom for compiler-internal scratch when setting
    vmem_limit_bytes, and a further ~12 MiB for the tile-selection budget
    (BlockSpec double-buffering is already counted explicitly below).
    """
    try:
        cap = int(pltpu.get_tpu_info().vmem_capacity_bytes)
    except Exception:  # unknown part / emulator: assume the smallest (v7x)
        cap = 64 << 20
    limit = max(32 << 20, min(cap - (16 << 20), 112 << 20))
    budget = max(20 << 20, limit - (12 << 20))
    return budget, limit


def _choose_tiles(n, d_in, hidden, d_out, budget):
    """Pick (tn, tk) and padded dims from a VMEM byte budget.

    All byte counts are pessimistic (2 pipeline buffers for every operand) so
    the choice stays valid even if single-buffering of constants falls back.
    """
    d_in_p = _round_up(d_in, 128)
    h_p = _round_up(hidden, 128)
    d_out_p = _round_up(d_out, 128)

    # ---- K tiling --------------------------------------------------------
    # Keep the double-buffered bf16 w1 K-slab under ~1/3 of the budget.
    tk_cap = max(128, ((budget // 3) // (4 * h_p)) // 128 * 128)
    if d_in_p <= tk_cap:
        tk = d_in_p                                   # nk == 1: w1 resident
    else:
        nk0 = _cdiv(d_in_p, tk_cap)
        tk = _round_up(_cdiv(d_in_p, nk0), 128)       # minimal K padding

    def _fixed(tk_):   # VMEM that does not scale with tn
        return (4 * tk_ * h_p            # bf16 w1 slab, 2 buffers
                + 4 * h_p * d_out_p      # bf16 w2, 2 buffers (pessimistic)
                + 8 * (h_p + d_out_p))   # f32 biases, 2 buffers (pessimistic)

    def _per_row(tk_):  # VMEM per batch row
        return (4 * tk_                  # bf16 x tile, 2 buffers
                + 8 * d_out_p            # f32 out tile, 2 buffers
                + 4 * h_p)               # f32 accumulator scratch

    # If even a 16-row batch tile would not fit, shrink tk further (more K
    # steps, but stays inside VMEM - required on v7x for large hidden dims).
    while tk > 128 and budget - _fixed(tk) < 16 * _per_row(tk):
        tk = max(128, ((tk // 2) // 128) * 128)
    nk = _cdiv(d_in_p, tk)
    d_in_pad = nk * tk

    # ---- batch tiling ------------------------------------------------------
    tn_cap = max(16, (budget - _fixed(tk)) // _per_row(tk))
    # For large batches force >= 2 tiles so the parallel grid axis can span
    # both TensorCores on dual-TC parts (free when nk == 1: w1 is loaded once).
    want_two = n >= 256
    nb = max(2 if want_two else 1, _cdiv(n, tn_cap))
    tn = _cdiv(n, nb)
    align = 128 if tn >= 128 else 16                  # MXU-M / bf16 sublane pack
    tn = _round_up(tn, align)
    if tn > tn_cap:
        tn = max(16, (tn_cap // align) * align if tn_cap >= align else 16)
    n_pad = _round_up(n, tn)
    return tn, tk, n_pad, d_in_pad, h_p, d_out_p


def _pad_cast_2d(a, rows, cols, dtype):
    """Cast and (only when actually needed) zero-pad a 2-D operand."""
    a = a.astype(dtype)
    r, c = a.shape
    if r == rows and c == cols:
        return a                      # skip the extra HBM read+write pass
    return jnp.zeros((rows, cols), dtype).at[:r, :c].set(a)


def mlp_kernel(x_ref, w1_ref, b1_ref, w2_ref, b2_ref, o_ref, h_acc):
    # Grid = (batch tiles, K tiles).  K is the reduction axis of the first
    # matmul; the hidden pre-activation is accumulated in f32 VMEM scratch.
    k = pl.program_id(1)

    @pl.when(k == 0)
    def _():
        # Fold the first-layer bias into the accumulator init so the final
        # (longest, pipeline-gating) K step does not pay this VPU add.
        h_acc[...] = jnp.zeros_like(h_acc) + b1_ref[...]

    # bf16 x bf16 -> f32 accumulation on the MXU.
    h_acc[...] += jnp.dot(x_ref[...], w1_ref[...],
                          preferred_element_type=jnp.float32)

    @pl.when(k == pl.num_programs(1) - 1)
    def _():
        h = jnp.maximum(h_acc[...], 0.0)               # act='relu'
        out = jnp.dot(h.astype(w2_ref.dtype), w2_ref[...],
                      preferred_element_type=jnp.float32) + b2_ref[...]
        o_ref[...] = out.astype(o_ref.dtype)


def base_model_forward(x_nchw, w1, b1, w2, b2):
    """Forward pass of the concrete BaseModel instantiation.

    x_nchw: (N, C, H, W) float32
    w1: (D_in, hidden)  b1: (hidden,)  w2: (hidden, output_dim)  b2: (output_dim,)
    returns: (N, output_dim) float32
    """
    n = x_nchw.shape[0]
    d_in = 1
    for s in x_nchw.shape[1:]:
        d_in *= s
    assert d_in == w1.shape[0]
    hidden, d_out = w1.shape[1], w2.shape[1]

    budget, vmem_limit = _vmem_budgets()
    tn, tk, n_p, d_in_p, h_p, d_out_p = _choose_tiles(n, d_in, hidden, d_out, budget)
    nb, nk = n_p // tn, d_in_p // tk

    # ---- operands: bf16 MXU inputs, f32 accumulation / bias / ReLU --------
    x2d = x_nchw.reshape(n, d_in)                      # == torch.flatten(x, 1)
    x_p = _pad_cast_2d(x2d, n_p, d_in_p, jnp.bfloat16)
    w1_p = _pad_cast_2d(w1, d_in_p, h_p, jnp.bfloat16)
    w2_p = _pad_cast_2d(w2, h_p, d_out_p, jnp.bfloat16)
    b1_p = _pad_cast_2d(b1.reshape(1, -1), 1, h_p, jnp.float32)
    b2_p = _pad_cast_2d(b2.reshape(1, -1), 1, d_out_p, jnp.float32)

    flops = 2 * n_p * (d_in_p * h_p + h_p * d_out_p)
    w1_streams = nb if nk > 1 else 1       # w1 re-streamed per batch tile only if K is tiled
    bytes_accessed = (x_p.size * 2 + w1_p.size * 2 * w1_streams
                      + w2_p.size * 2 + (h_p + d_out_p) * 4
                      + n_p * d_out_p * 4)

    def run(single_buffer_constants):
        const_mode = ({"pipeline_mode": pl.Buffered(1)}
                      if single_buffer_constants else {})
        w1_mode = const_mode if nk == 1 else {}
        grid_spec = pltpu.PrefetchScalarGridSpec(
            num_scalar_prefetch=0,
            grid=(nb, nk),
            in_specs=[
                pl.BlockSpec((tn, tk), lambda i, k: (i, k)),               # x tiles
                pl.BlockSpec((tk, h_p), lambda i, k: (k, 0), **w1_mode),   # w1 K-slabs
                pl.BlockSpec((1, h_p), lambda i, k: (0, 0), **const_mode),  # b1
                pl.BlockSpec((h_p, d_out_p), lambda i, k: (0, 0), **const_mode),  # w2
                pl.BlockSpec((1, d_out_p), lambda i, k: (0, 0), **const_mode),    # b2
            ],
            out_specs=pl.BlockSpec((tn, d_out_p), lambda i, k: (i, 0)),
            scratch_shapes=[pltpu.VMEM((tn, h_p), jnp.float32)],
        )
        return pl.pallas_call(
            mlp_kernel,
            out_shape=jax.ShapeDtypeStruct((n_p, d_out_p), jnp.float32),
            grid_spec=grid_spec,
            compiler_params=pltpu.CompilerParams(
                dimension_semantics=("parallel", "arbitrary"),
                vmem_limit_bytes=vmem_limit),
            cost_estimate=pl.CostEstimate(
                flops=flops, transcendentals=0, bytes_accessed=bytes_accessed),
        )(x_p, w1_p, b1_p, w2_p, b2_p)

    try:
        # Constant-index operands never change block -> single pipeline buffer.
        out_p = run(True)
    except Exception:
        # Fallback for Pallas versions without BlockSpec(pipeline_mode=...).
        out_p = run(False)

    return out_p[:n, :d_out]


def kaiming_normal_std(fan_in_: int) -> float:
    # matches kaiming_normal_std() in the reference: sqrt(2 / fan_in)
    return (2.0 / fan_in_) ** 0.5


def init_params(key, d_in, hidden, d_out):
    """kaiming_normal weights, zero biases — mirrors BaseModel.reset_parameters
    with initialization_strategy='kaiming_normal'."""
    k1, k2 = jax.random.split(key)
    # torch Linear weight is (out, in) with fan_in = in_features; we store (in, out).
    w1 = jax.random.normal(k1, (d_in, hidden), jnp.float32) * kaiming_normal_std(d_in)
    w2 = jax.random.normal(k2, (hidden, d_out), jnp.float32) * kaiming_normal_std(hidden)
    b1 = jnp.zeros((hidden,), jnp.float32)
    b2 = jnp.zeros((d_out,), jnp.float32)
    return w1, b1, w2, b2


if __name__ == "__main__":
    # Small shapes consistent with an image-classifier BaseModel subclass:
    # x: NCHW = (2, 4, 16, 16), hidden=32, output_dim=10.
    N, C, H, W = 2, 4, 16, 16
    HIDDEN = 32
    OUTPUT_DIM = 10
    D_IN = C * H * W

    key = jax.random.PRNGKey(0)
    kx, kp = jax.random.split(key)
    x = jax.random.normal(kx, (N, C, H, W), jnp.float32)
    w1, b1, w2, b2 = init_params(kp, D_IN, HIDDEN, OUTPUT_DIM)

    out = base_model_forward(x, w1, b1, w2, b2)
    jax.block_until_ready(out)
    assert out.shape == (N, OUTPUT_DIM)

    # Reference with the same bf16-operand / f32-accumulate recipe.
    xb = x.reshape(N, D_IN).astype(jnp.bfloat16)
    h_ref = jnp.dot(xb, w1.astype(jnp.bfloat16),
                    preferred_element_type=jnp.float32) + b1
    h_ref = jnp.maximum(h_ref, 0.0)
    ref = jnp.dot(h_ref.astype(jnp.bfloat16), w2.astype(jnp.bfloat16),
                  preferred_element_type=jnp.float32) + b2
    assert jnp.allclose(out, ref, atol=1e-2, rtol=1e-2), float(
        jnp.max(jnp.abs(out - ref)))

    # Loose sanity check against the pure-f32 math as well.
    ref_f32 = jnp.maximum(x.reshape(N, D_IN) @ w1 + b1, 0.0) @ w2 + b2
    assert jnp.allclose(out, ref_f32, atol=1e-1, rtol=1e-1)

    # TODO(synk): reset_parameters / permutation_spec / get_init_stds /
    # get_random_permutation are host-side bookkeeping with no kernel
    # equivalent; only forward() is fused.
    print("KERNEL_OK")
</pallas_src>

<mosaic_0001>
module attributes {stable_mosaic.version = 11 : i64} {
  func.func @mlp_kernel(%arg0: i32, %arg1: i32, %arg2: memref<16x1024xbf16, #tpu.memory_space<vmem>>, %arg3: memref<1024x128xbf16, #tpu.memory_space<vmem>>, %arg4: memref<1x128xf32, #tpu.memory_space<vmem>>, %arg5: memref<128x128xbf16, #tpu.memory_space<vmem>>, %arg6: memref<1x128xf32, #tpu.memory_space<vmem>>, %arg7: memref<16x128xf32, #tpu.memory_space<vmem>>, %arg8: memref<16x128xf32, #tpu.memory_space<vmem>>) attributes {dimension_semantics = [#tpu.dimension_semantics<parallel>, #tpu.dimension_semantics<arbitrary>], iteration_bounds = array<i64: 1, 1>, scalar_prefetch = 0 : i64, scratch_operands = 1 : i64, tpu.core_type = #tpu.core_type<tc>, window_params = [{transform_indices = @transform_0, window_bounds = array<i64: 16, 1024>}, {pipeline_mode = #tpu.pipeline_mode<synchronous>, transform_indices = @transform_1, window_bounds = array<i64: 1024, 128>}, {pipeline_mode = #tpu.pipeline_mode<synchronous>, transform_indices = @transform_2, window_bounds = array<i64: 1, 128>}, {pipeline_mode = #tpu.pipeline_mode<synchronous>, transform_indices = @transform_3, window_bounds = array<i64: 128, 128>}, {pipeline_mode = #tpu.pipeline_mode<synchronous>, transform_indices = @transform_4, window_bounds = array<i64: 1, 128>}, {transform_indices = @transform_5, window_bounds = array<i64: 16, 128>}]} {
    %c0_i32 = arith.constant 0 : i32
    %0 = arith.cmpi eq, %arg1, %c0_i32 : i32
    %1 = arith.extui %0 : i1 to i32
    %c0_i32_0 = arith.constant 0 : i32
    %2 = arith.cmpi ne, %1, %c0_i32_0 : i32
    scf.if %2 {
      %cst_10 = arith.constant 0.000000e+00 : f32
      %12 = vector.broadcast %cst_10 : f32 to vector<16x128xf32>
      %c0_11 = arith.constant 0 : index
      %c0_12 = arith.constant 0 : index
      %13 = vector.load %arg4[%c0_11, %c0_12] : memref<1x128xf32, #tpu.memory_space<vmem>>, vector<1x128xf32>
      %14 = vector.broadcast %13 : vector<1x128xf32> to vector<16x128xf32>
      %15 = arith.addf %12, %14 : vector<16x128xf32>
      %c0_13 = arith.constant 0 : index
      %c0_14 = arith.constant 0 : index
      %16 = vector.load %arg8[%c0_13, %c0_14] : memref<16x128xf32, #tpu.memory_space<vmem>>, vector<16x128xf32>
      tpu.vector_store %arg8[%c0_13, %c0_14], %15 {strides = array<i32>} : memref<16x128xf32, #tpu.memory_space<vmem>>, vector<16x128xf32>,
    } else {
    }
    %c0 = arith.constant 0 : index
    %c0_1 = arith.constant 0 : index
    %3 = vector.load %arg8[%c0, %c0_1] : memref<16x128xf32, #tpu.memory_space<vmem>>, vector<16x128xf32>
    %c0_2 = arith.constant 0 : index
    %c0_3 = arith.constant 0 : index
    %4 = vector.load %arg2[%c0_2, %c0_3] : memref<16x1024xbf16, #tpu.memory_space<vmem>>, vector<16x1024xbf16>
    %c0_4 = arith.constant 0 : index
    %c0_5 = arith.constant 0 : index
    %5 = vector.load %arg3[%c0_4, %c0_5] : memref<1024x128xbf16, #tpu.memory_space<vmem>>, vector<1024x128xbf16>
    %cst = arith.constant dense<0.000000e+00> : vector<16x128xf32>
    %6 = tpu.matmul %4, %5, %cst {dimension_numbers = #tpu.dot_dimension_numbers<[1], [0], [0], [1], [0, 0, 1, 1], [], []>} : vector<16x1024xbf16>, vector<1024x128xbf16>, vector<16x128xf32> -> vector<16x128xf32>
    %7 = arith.addf %3, %6 : vector<16x128xf32>
    %c0_6 = arith.constant 0 : index
    %c0_7 = arith.constant 0 : index
    %8 = vector.load %arg8[%c0_6, %c0_7] : memref<16x128xf32, #tpu.memory_space<vmem>>, vector<16x128xf32>
    tpu.vector_store %arg8[%c0_6, %c0_7], %7 {strides = array<i32>} : memref<16x128xf32, #tpu.memory_space<vmem>>, vector<16x128xf32>,
    %c0_i32_8 = arith.constant 0 : i32
    %9 = arith.cmpi eq, %arg1, %c0_i32_8 : i32
    %10 = arith.extui %9 : i1 to i32
    %c0_i32_9 = arith.constant 0 : i32
    %11 = arith.cmpi ne, %10, %c0_i32_9 : i32
    scf.if %11 {
      %c0_10 = arith.constant 0 : index
      %c0_11 = arith.constant 0 : index
      %12 = vector.load %arg8[%c0_10, %c0_11] : memref<16x128xf32, #tpu.memory_space<vmem>>, vector<16x128xf32>
      %cst_12 = arith.constant 0.000000e+00 : f32
      %13 = vector.broadcast %cst_12 : f32 to vector<16x128xf32>
      %14 = arith.maximumf %12, %13 : vector<16x128xf32>
      %15 = arith.truncf %14 : vector<16x128xf32> to vector<16x128xbf16>
      %c0_13 = arith.constant 0 : index
      %c0_14 = arith.constant 0 : index
      %16 = vector.load %arg5[%c0_13, %c0_14] : memref<128x128xbf16, #tpu.memory_space<vmem>>, vector<128x128xbf16>
      %cst_15 = arith.constant dense<0.000000e+00> : vector<16x128xf32>
      %17 = tpu.matmul %15, %16, %cst_15 {dimension_numbers = #tpu.dot_dimension_numbers<[1], [0], [0], [1], [0, 0, 1, 1], [], []>} : vector<16x128xbf16>, vector<128x128xbf16>, vector<16x128xf32> -> vector<16x128xf32>
      %c0_16 = arith.constant 0 : index
      %c0_17 = arith.constant 0 : index
      %18 = vector.load %arg6[%c0_16, %c0_17] : memref<1x128xf32, #tpu.memory_space<vmem>>, vector<1x128xf32>
      %19 = vector.broadcast %18 : vector<1x128xf32> to vector<16x128xf32>
      %20 = arith.addf %17, %19 : vector<16x128xf32>
      %c0_18 = arith.constant 0 : index
      %c0_19 = arith.constant 0 : index
      %21 = vector.load %arg7[%c0_18, %c0_19] : memref<16x128xf32, #tpu.memory_space<vmem>>, vector<16x128xf32>
      tpu.vector_store %arg7[%c0_18, %c0_19], %20 {strides = array<i32>} : memref<16x128xf32, #tpu.memory_space<vmem>>, vector<16x128xf32>,
    } else {
    }
    return
  }
  func.func @transform_0(%arg0: i32, %arg1: i32) -> (i32, i32) {
    %c0_i32 = arith.constant 0 : i32
    return %arg0, %arg1 : i32, i32
  }
  func.func @transform_1(%arg0: i32, %arg1: i32) -> (i32, i32) {
    %c0_i32 = arith.constant 0 : i32
    %c0_i32_0 = arith.constant 0 : i32
    return %arg1, %c0_i32 : i32, i32
  }
  func.func @transform_2(%arg0: i32, %arg1: i32) -> (i32, i32) {
    %c0_i32 = arith.constant 0 : i32
    %c0_i32_0 = arith.constant 0 : i32
    %c0_i32_1 = arith.constant 0 : i32
    return %c0_i32, %c0_i32_0 : i32, i32
  }
  func.func @transform_3(%arg0: i32, %arg1: i32) -> (i32, i32) {
    %c0_i32 = arith.constant 0 : i32
    %c0_i32_0 = arith.constant 0 : i32
    %c0_i32_1 = arith.constant 0 : i32
    return %c0_i32, %c0_i32_0 : i32, i32
  }
  func.func @transform_4(%arg0: i32, %arg1: i32) -> (i32, i32) {
    %c0_i32 = arith.constant 0 : i32
    %c0_i32_0 = arith.constant 0 : i32
    %c0_i32_1 = arith.constant 0 : i32
    return %c0_i32, %c0_i32_0 : i32, i32
  }
  func.func @transform_5(%arg0: i32, %arg1: i32) -> (i32, i32) {
    %c0_i32 = arith.constant 0 : i32
    %c0_i32_0 = arith.constant 0 : i32
    return %arg0, %c0_i32 : i32, i32
  }
}

module attributes {stable_mosaic.version = 11 : i64} {
  func.func @mlp_kernel(%arg0: i32, %arg1: i32, %arg2: memref<16x1024xbf16, #tpu.memory_space<vmem>>, %arg3: memref<1024x128xbf16, #tpu.memory_space<vmem>>, %arg4: memref<1x128xf32, #tpu.memory_space<vmem>>, %arg5: memref<128x128xbf16, #tpu.memory_space<vmem>>, %arg6: memref<1x128xf32, #tpu.memory_space<vmem>>, %arg7: memref<16x128xf32, #tpu.memory_space<vmem>>, %arg8: memref<16x128xf32, #tpu.memory_space<vmem>>) attributes {dimension_semantics = [#tpu.dimension_semantics<parallel>, #tpu.dimension_semantics<arbitrary>], iteration_bounds = array<i64: 1, 1>, scalar_prefetch = 0 : i64, scratch_operands = 1 : i64, tpu.core_type = #tpu.core_type<tc>, window_params = [{transform_indices = @transform_0, window_bounds = array<i64: 16, 1024>}, {transform_indices = @transform_1, window_bounds = array<i64: 1024, 128>}, {pipeline_mode = #tpu.pipeline_mode<synchronous>, transform_indices = @transform_2, window_bounds = array<i64: 1, 128>}, {pipeline_mode = #tpu.pipeline_mode<synchronous>, transform_indices = @transform_3, window_bounds = array<i64: 128, 128>}, {pipeline_mode = #tpu.pipeline_mode<synchronous>, transform_indices = @transform_4, window_bounds = array<i64: 1, 128>}, {transform_indices = @transform_5, window_bounds = array<i64: 16, 128>}]} {
    %c0_i32 = arith.constant 0 : i32
    %0 = arith.cmpi eq, %arg1, %c0_i32 : i32
    %1 = arith.extui %0 : i1 to i32
    %c0_i32_0 = arith.constant 0 : i32
    %2 = arith.cmpi ne, %1, %c0_i32_0 : i32
    scf.if %2 {
      %cst_10 = arith.constant 0.000000e+00 : f32
      %12 = vector.broadcast %cst_10 : f32 to vector<16x128xf32>
      %c0_11 = arith.constant 0 : index
      %c0_12 = arith.constant 0 : index
      %13 = vector.load %arg4[%c0_11, %c0_12] : memref<1x128xf32, #tpu.memory_space<vmem>>, vector<1x128xf32>
      %14 = vector.broadcast %13 : vector<1x128xf32> to vector<16x128xf32>
      %15 = arith.addf %12, %14 : vector<16x128xf32>
      %c0_13 = arith.constant 0 : index
      %c0_14 = arith.constant 0 : index
      %16 = vector.load %arg8[%c0_13, %c0_14] : memref<16x128xf32, #tpu.memory_space<vmem>>, vector<16x128xf32>
      tpu.vector_store %arg8[%c0_13, %c0_14], %15 {strides = array<i32>} : memref<16x128xf32, #tpu.memory_space<vmem>>, vector<16x128xf32>,
    } else {
    }
    %c0 = arith.constant 0 : index
    %c0_1 = arith.constant 0 : index
    %3 = vector.load %arg8[%c0, %c0_1] : memref<16x128xf32, #tpu.memory_space<vmem>>, vector<16x128xf32>
    %c0_2 = arith.constant 0 : index
    %c0_3 = arith.constant 0 : index
    %4 = vector.load %arg2[%c0_2, %c0_3] : memref<16x1024xbf16, #tpu.memory_space<vmem>>, vector<16x1024xbf16>
    %c0_4 = arith.constant 0 : index
    %c0_5 = arith.constant 0 : index
    %5 = vector.load %arg3[%c0_4, %c0_5] : memref<1024x128xbf16, #tpu.memory_space<vmem>>, vector<1024x128xbf16>
    %cst = arith.constant dense<0.000000e+00> : vector<16x128xf32>
    %6 = tpu.matmul %4, %5, %cst {dimension_numbers = #tpu.dot_dimension_numbers<[1], [0], [0], [1], [0, 0, 1, 1], [], []>} : vector<16x1024xbf16>, vector<1024x128xbf16>, vector<16x128xf32> -> vector<16x128xf32>
    %7 = arith.addf %3, %6 : vector<16x128xf32>
    %c0_6 = arith.constant 0 : index
    %c0_7 = arith.constant 0 : index
    %8 = vector.load %arg8[%c0_6, %c0_7] : memref<16x128xf32, #tpu.memory_space<vmem>>, vector<16x128xf32>
    tpu.vector_store %arg8[%c0_6, %c0_7], %7 {strides = array<i32>} : memref<16x128xf32, #tpu.memory_space<vmem>>, vector<16x128xf32>,
    %c0_i32_8 = arith.constant 0 : i32
    %9 = arith.cmpi eq, %arg1, %c0_i32_8 : i32
    %10 = arith.extui %9 : i1 to i32
    %c0_i32_9 = arith.constant 0 : i32
    %11 = arith.cmpi ne, %10, %c0_i32_9 : i32
    scf.if %11 {
      %c0_10 = arith.constant 0 : index
      %c0_11 = arith.constant 0 : index
      %12 = vector.load %arg8[%c0_10, %c0_11] : memref<16x128xf32, #tpu.memory_space<vmem>>, vector<16x128xf32>
      %cst_12 = arith.constant 0.000000e+00 : f32
      %13 = vector.broadcast %cst_12 : f32 to vector<16x128xf32>
      %14 = arith.maximumf %12, %13 : vector<16x128xf32>
      %15 = arith.truncf %14 : vector<16x128xf32> to vector<16x128xbf16>
      %c0_13 = arith.constant 0 : index
      %c0_14 = arith.constant 0 : index
      %16 = vector.load %arg5[%c0_13, %c0_14] : memref<128x128xbf16, #tpu.memory_space<vmem>>, vector<128x128xbf16>
      %cst_15 = arith.constant dense<0.000000e+00> : vector<16x128xf32>
      %17 = tpu.matmul %15, %16, %cst_15 {dimension_numbers = #tpu.dot_dimension_numbers<[1], [0], [0], [1], [0, 0, 1, 1], [], []>} : vector<16x128xbf16>, vector<128x128xbf16>, vector<16x128xf32> -> vector<16x128xf32>
      %c0_16 = arith.constant 0 : index
      %c0_17 = arith.constant 0 : index
      %18 = vector.load %arg6[%c0_16, %c0_17] : memref<1x128xf32, #tpu.memory_space<vmem>>, vector<1x128xf32>
      %19 = vector.broadcast %18 : vector<1x128xf32> to vector<16x128xf32>
      %20 = arith.addf %17, %19 : vector<16x128xf32>
      %c0_18 = arith.constant 0 : index
      %c0_19 = arith.constant 0 : index
      %21 = vector.load %arg7[%c0_18, %c0_19] : memref<16x128xf32, #tpu.memory_space<vmem>>, vector<16x128xf32>
      tpu.vector_store %arg7[%c0_18, %c0_19], %20 {strides = array<i32>} : memref<16x128xf32, #tpu.memory_space<vmem>>, vector<16x128xf32>,
    } else {
    }
    return
  }
  func.func @transform_0(%arg0: i32, %arg1: i32) -> (i32, i32) {
    %c0_i32 = arith.constant 0 : i32
    return %arg0, %arg1 : i32, i32
  }
  func.func @transform_1(%arg0: i32, %arg1: i32) -> (i32, i32) {
    %c0_i32 = arith.constant 0 : i32
    %c0_i32_0 = arith.constant 0 : i32
    return %arg1, %c0_i32 : i32, i32
  }
  func.func @transform_2(%arg0: i32, %arg1: i32) -> (i32, i32) {
    %c0_i32 = arith.constant 0 : i32
    %c0_i32_0 = arith.constant 0 : i32
    %c0_i32_1 = arith.constant 0 : i32
    return %c0_i32, %c0_i32_0 : i32, i32
  }
  func.func @transform_3(%arg0: i32, %arg1: i32) -> (i32, i32) {
    %c0_i32 = arith.constant 0 : i32
    %c0_i32_0 = arith.constant 0 : i32
    %c0_i32_1 = arith.constant 0 : i32
    return %c0_i32, %c0_i32_0 : i32, i32
  }
  func.func @transform_4(%arg0: i32, %arg1: i32) -> (i32, i32) {
    %c0_i32 = arith.constant 0 : i32
    %c0_i32_0 = arith.constant 0 : i32
    %c0_i32_1 = arith.constant 0 : i32
    return %c0_i32, %c0_i32_0 : i32, i32
  }
  func.func @transform_5(%arg0: i32, %arg1: i32) -> (i32, i32) {
    %c0_i32 = arith.constant 0 : i32
    %c0_i32_0 = arith.constant 0 : i32
    return %arg0, %c0_i32 : i32, i32
  }
}

</mosaic_0001>

<llo_original>
// kernel: tpu_custom_call.1
$region0: #{tpu_custom_call.1}
  #allocation0 [shape = 'u32[]', space=smem, size = 0x4, offset = 0x4, fixed_abs, tag = 'smem constant byte address 0x4 - core index']
  #allocation1 [shape = 'u32[144,128]{1,0:T(1,128)}', space=vmem, size = 0x12000, scoped, tag = 'internal scratch']
  #allocation2 [shape = 'f32[16,128]{1,0:T(8,128)}', space=vmem, size = 0x2000, scoped, tag = 'scratch operand']
  %s0 = inlined_call_operand.hbm [shape: bf16[16,1024], index: 0, kind: input, shape index: {}]
  %s1 = inlined_call_operand.hbm [shape: bf16[1024,128], index: 1, kind: input, shape index: {}]
  %s2 = inlined_call_operand.vmem [shape: f32[1,128], index: 2, kind: input, shape index: {}]
  %s3 = inlined_call_operand.hbm [shape: bf16[128,128], index: 3, kind: input, shape index: {}]
  %s4 = inlined_call_operand.vmem [shape: f32[1,128], index: 4, kind: input, shape index: {}]
  %s5 = inlined_call_operand.hbm [shape: f32[16,128], index: 5, kind: output, shape index: {}]
  %s6 = sld [smem:[#allocation0]]
  $region50: #{tpu_custom_call.1} parent=0
    _
  %s8 = ssub.s32 1, %s6
  %s9 = scalar_select 0, %s8, %s6
  $region1: #{tpu_custom_call.1} parent=0
    #allocation3 [shape = 'u8[32768]{0}', space=vmem, size = 0x8000, scoped, tag = 'input window, operand 0, single buffered']
    #allocation4 [shape = 's32[1]{0}', space=sflag, size = 0x4, scoped, tag = 'scoped memory for tpu_custom_call.1']
    #allocation5 [shape = 's32[1]{0}', space=sflag, size = 0x4, scoped, tag = 'scoped memory for tpu_custom_call.1']
    #allocation6 [shape = 'u8[262144]{0}', space=vmem, size = 0x40000, scoped, tag = 'input window, operand 1, single buffered']
    #allocation7 [shape = 's32[1]{0}', space=sflag, size = 0x4, scoped, tag = 'scoped memory for tpu_custom_call.1']
    #allocation8 [shape = 'u8[32768]{0}', space=vmem, size = 0x8000, scoped, tag = 'input window, operand 3, single buffered']
    #allocation9 [shape = 'u8[8192]{0}', space=vmem, size = 0x2000, scoped, tag = 'output window, operand 0, single buffered']
    %10 = vsyncpa [#allocation4], 0
    %11 = vsyncpa [#allocation7], 0
    %12 = vsyncpa [#allocation5], 0
    // Predicated region
    $region2: #{tpu_custom_call.1} parent=1 // pred_check
      _
    $region3: #{tpu_custom_call.1} parent=1 // pred_check_branch
      %14 = sbr.rel (0) target = $region5
    $region4: #{tpu_custom_call.1} parent=1 // pred_region
      %s16 = ssub.s32 1024, 1024
      %17 = vsyncadd [#allocation4], %s16
      %s18 = sshll.u32 [#allocation3], 4
      %s19 = int_to_ptr.vmem [resolvable:$true] %s18
      %24 = dma.hbm_to_vmem [thread:$0]  %s0, 1024, %s19, [#allocation4], 512, 512, 32
    $region5: #{tpu_custom_call.1} parent=1 // pred_fallthru
      _
    // Predicated region
    $region6: #{tpu_custom_call.1} parent=1 // pred_check
      _
    $region7: #{tpu_custom_call.1} parent=1 // pred_check_branch
      %26 = sbr.rel (0) target = $region9
    $region8: #{tpu_custom_call.1} parent=1 // pred_region
      %s28 = ssub.s32 8192, 8192
      %29 = vsyncadd [#allocation7], %s28
      %s30 = sshll.u32 [#allocation6], 4
      %s31 = int_to_ptr.vmem [resolvable:$true] %s30
      %36 = dma.hbm_to_vmem [thread:$0]  %s1, 8192, %s31, [#allocation7], 64, 64, 4
    $region9: #{tpu_custom_call.1} parent=1 // pred_fallthru
      _
    // Predicated region
    $region10: #{tpu_custom_call.1} parent=1 // pred_check
      _
    $region11: #{tpu_custom_call.1} parent=1 // pred_check_branch
      %38 = sbr.rel (0) target = $region13
    $region12: #{tpu_custom_call.1} parent=1 // pred_region
      _
    $region13: #{tpu_custom_call.1} parent=1 // pred_fallthru
      _
    // Predicated region
    $region14: #{tpu_custom_call.1} parent=1 // pred_check
      _
    $region15: #{tpu_custom_call.1} parent=1 // pred_check_branch
      %40 = sbr.rel (0) target = $region17
    $region16: #{tpu_custom_call.1} parent=1 // pred_region
      %s42 = ssub.s32 1024, 1024
      %43 = vsyncadd [#allocation7], %s42
      %s44 = sshll.u32 [#allocation8], 4
      %s45 = int_to_ptr.vmem [resolvable:$true] %s44
      %50 = dma.hbm_to_vmem [thread:$0]  %s3, 1024, %s45, [#allocation7], 64, 64, 4
    $region17: #{tpu_custom_call.1} parent=1 // pred_fallthru
      _
    // Predicated region
    $region18: #{tpu_custom_call.1} parent=1 // pred_check
      _
    $region19: #{tpu_custom_call.1} parent=1 // pred_check_branch
      %52 = sbr.rel (0) target = $region21
    $region20: #{tpu_custom_call.1} parent=1 // pred_region
      _
    $region21: #{tpu_custom_call.1} parent=1 // pred_fallthru
      _
    // Predicated region
    $region22: #{tpu_custom_call.1} parent=1 // pred_check
      _
    $region23: #{tpu_custom_call.1} parent=1 // pred_check_branch
      %54 = sbr.rel (0) target = $region25
    $region24: #{tpu_custom_call.1} parent=1 // pred_region
      %55 = dma.done [#allocation4], 1024
    $region25: #{tpu_custom_call.1} parent=1 // pred_fallthru
      _
    // Predicated region
    $region26: #{tpu_custom_call.1} parent=1 // pred_check
      _
    $region27: #{tpu_custom_call.1} parent=1 // pred_check_branch
      %57 = sbr.rel (0) target = $region29
    $region28: #{tpu_custom_call.1} parent=1 // pred_region
      %58 = dma.done [#allocation7], 8192
    $region29: #{tpu_custom_call.1} parent=1 // pred_fallthru
      _
    // Predicated region
    $region30: #{tpu_custom_call.1} parent=1 // pred_check
      _
    $region31: #{tpu_custom_call.1} parent=1 // pred_check_branch
      %60 = sbr.rel (0) target = $region33
    $region32: #{tpu_custom_call.1} parent=1 // pred_region
      %61 = dma.done [#allocation7], 1024
    $region33: #{tpu_custom_call.1} parent=1 // pred_fallthru
      _
    %p63 = scmp.eq.s32.totalorder 0, 0
    // Predicated region
    $region34: #{tpu_custom_call.1} parent=1 // pred_check
      %p64 = pneg %p63
    $region35: #{tpu_custom_call.1} parent=1 // pred_check_branch
      %66 = sbr.rel (%p64) target = $region37
    $region36: #{tpu_custom_call.1} parent=1 // pred_region
      %v67 = vld [vmem:[%s2] sm:$0x1]
      %v69 = vlaneseq
      %v70 = vshrl.u32 %v69, 7
      %v71 = vsub.s32 0, %v70
      %v72 = vrot.slane %v67, %v71
      %v74 = vadd.f32 %v72, 0.0
      %75 = vst [vmem:[#allocation2] sm:$0xff] %v74
      %76 = vst [vmem:[#allocation2 + $0x8] sm:$0xff] %v74
    $region37: #{tpu_custom_call.1} parent=1 // pred_fallthru
      _
    %v77 = vld [vmem:[#allocation2] sm:$0xff]
    %v78 = vld [vmem:[#allocation2 + $0x8] sm:$0xff]
    %v79 = vld [vmem:[#allocation3] sm:$0xff]
    %v80 = vld [vmem:[#allocation3 + $0x8] sm:$0xff]
    %v81 = vld [vmem:[#allocation3 + $0x10] sm:$0xff]
    %v82 = vld [vmem:[#allocation3 + $0x18] sm:$0xff]
    %v83 = vld [vmem:[#allocation3 + $0x20] sm:$0xff]
    %v84 = vld [vmem:[#allocation3 + $0x28] sm:$0xff]
    %v85 = vld [vmem:[#allocation3 + $0x30] sm:$0xff]
    %v86 = vld [vmem:[#allocation3 + $0x38] sm:$0xff]
    %v87 = vld [vmem:[#allocation6] sm:$0xf]
    %v88 = vld [vmem:[#allocation6 + $0x4] sm:$0xf]
    %v89 = vld [vmem:[#allocation6 + $0x8] sm:$0xf]
    %v90 = vld [vmem:[#allocation6 + $0xc] sm:$0xf]
    %v91 = vld [vmem:[#allocation6 + $0x10] sm:$0xf]
    %v92 = vld [vmem:[#allocation6 + $0x14] sm:$0xf]
    %v93 = vld [vmem:[#allocation6 + $0x18] sm:$0xf]
    %v94 = vld [vmem:[#allocation6 + $0x1c] sm:$0xf]
    %v95 = vld [vmem:[#allocation6 + $0x20] sm:$0xf]
    %v96 = vld [vmem:[#allocation6 + $0x24] sm:$0xf]
    %v97 = vld [vmem:[#allocation6 + $0x28] sm:$0xf]
    %v98 = vld [vmem:[#allocation6 + $0x2c] sm:$0xf]
    %v99 = vld [vmem:[#allocation6 + $0x30] sm:$0xf]
    %v100 = vld [vmem:[#allocation6 + $0x34] sm:$0xf]
    %v101 = vld [vmem:[#allocation6 + $0x38] sm:$0xf]
    %v102 = vld [vmem:[#allocation6 + $0x3c] sm:$0xf]
    %v103 = vld [vmem:[#allocation6 + $0x40] sm:$0xf]
    %v104 = vld [vmem:[#allocation6 + $0x44] sm:$0xf]
    %v105 = vld [vmem:[#allocation6 + $0x48] sm:$0xf]
    %v106 = vld [vmem:[#allocation6 + $0x4c] sm:$0xf]
    %v107 = vld [vmem:[#allocation6 + $0x50] sm:$0xf]
    %v108 = vld [vmem:[#allocation6 + $0x54] sm:$0xf]
    %v109 = vld [vmem:[#allocation6 + $0x58] sm:$0xf]
    %v110 = vld [vmem:[#allocation6 + $0x5c] sm:$0xf]
    %v111 = vld [vmem:[#allocation6 + $0x60] sm:$0xf]
    %v112 = vld [vmem:[#allocation6 + $0x64] sm:$0xf]
    %v113 = vld [vmem:[#allocation6 + $0x68] sm:$0xf]
    %v114 = vld [vmem:[#allocation6 + $0x6c] sm:$0xf]
    %v115 = vld [vmem:[#allocation6 + $0x70] sm:$0xf]
    %v116 = vld [vmem:[#allocation6 + $0x74] sm:$0xf]
    %v117 = vld [vmem:[#allocation6 + $0x78] sm:$0xf]
    %v118 = vld [vmem:[#allocation6 + $0x7c] sm:$0xf]
    %v119 = vld [vmem:[#allocation6 + $0x80] sm:$0xf]
    %v120 = vld [vmem:[#allocation6 + $0x84] sm:$0xf]
    %v121 = vld [vmem:[#allocation6 + $0x88] sm:$0xf]
    %v122 = vld [vmem:[#allocation6 + $0x8c] sm:$0xf]
    %v123 = vld [vmem:[#allocation6 + $0x90] sm:$0xf]
    %v124 = vld [vmem:[#allocation6 + $0x94] sm:$0xf]
    %v125 = vld [vmem:[#allocation6 + $0x98] sm:$0xf]
    %v126 = vld [vmem:[#allocation6 + $0x9c] sm:$0xf]
    %v127 = vld [vmem:[#allocation6 + $0xa0] sm:$0xf]
    %v128 = vld [vmem:[#allocation6 + $0xa4] sm:$0xf]
    %v129 = vld [vmem:[#allocation6 + $0xa8] sm:$0xf]
    %v130 = vld [vmem:[#allocation6 + $0xac] sm:$0xf]
    %v131 = vld [vmem:[#allocation6 + $0xb0] sm:$0xf]
    %v132 = vld [vmem:[#allocation6 + $0xb4] sm:$0xf]
    %v133 = vld [vmem:[#allocation6 + $0xb8] sm:$0xf]
    %v134 = vld [vmem:[#allocation6 + $0xbc] sm:$0xf]
    %v135 = vld [vmem:[#allocation6 + $0xc0] sm:$0xf]
    %v136 = vld [vmem:[#allocation6 + $0xc4] sm:$0xf]
    %v137 = vld [vmem:[#allocation6 + $0xc8] sm:$0xf]
    %v138 = vld [vmem:[#allocation6 + $0xcc] sm:$0xf]
    %v139 = vld [vmem:[#allocation6 + $0xd0] sm:$0xf]
    %v140 = vld [vmem:[#allocation6 + $0xd4] sm:$0xf]
    %v141 = vld [vmem:[#allocation6 + $0xd8] sm:$0xf]
    %v142 = vld [vmem:[#allocation6 + $0xdc] sm:$0xf]
    %v143 = vld [vmem:[#allocation6 + $0xe0] sm:$0xf]
    %v144 = vld [vmem:[#allocation6 + $0xe4] sm:$0xf]
    %v145 = vld [vmem:[#allocation6 + $0xe8] sm:$0xf]
    %v146 = vld [vmem:[#allocation6 + $0xec] sm:$0xf]
    %v147 = vld [vmem:[#allocation6 + $0xf0] sm:$0xf]
    %v148 = vld [vmem:[#allocation6 + $0xf4] sm:$0xf]
    %v149 = vld [vmem:[#allocation6 + $0xf8] sm:$0xf]
    %v150 = vld [vmem:[#allocation6 + $0xfc] sm:$0xf]
    %v151 = vld [vmem:[#allocation6 + $0x100] sm:$0xf]
    %v152 = vld [vmem:[#allocation6 + $0x104] sm:$0xf]
    %v153 = vld [vmem:[#allocation6 + $0x108] sm:$0xf]
    %v154 = vld [vmem:[#allocation6 + $0x10c] sm:$0xf]
    %v155 = vld [vmem:[#allocation6 + $0x110] sm:$0xf]
    %v156 = vld [vmem:[#allocation6 + $0x114] sm:$0xf]
    %v157 = vld [vmem:[#allocation6 + $0x118] sm:$0xf]
    %v158 = vld [vmem:[#allocation6 + $0x11c] sm:$0xf]
    %v159 = vld [vmem:[#allocation6 + $0x120] sm:$0xf]
    %v160 = vld [vmem:[#allocation6 + $0x124] sm:$0xf]
    %v161 = vld [vmem:[#allocation6 + $0x128] sm:$0xf]
    %v162 = vld [vmem:[#allocation6 + $0x12c] sm:$0xf]
    %v163 = vld [vmem:[#allocation6 + $0x130] sm:$0xf]
    %v164 = vld [vmem:[#allocation6 + $0x134] sm:$0xf]
    %v165 = vld [vmem:[#allocation6 + $0x138] sm:$0xf]
    %v166 = vld [vmem:[#allocation6 + $0x13c] sm:$0xf]
    %v167 = vld [vmem:[#allocation6 + $0x140] sm:$0xf]
    %v168 = vld [vmem:[#allocation6 + $0x144] sm:$0xf]
    %v169 = vld [vmem:[#allocation6 + $0x148] sm:$0xf]
    %v170 = vld [vmem:[#allocation6 + $0x14c] sm:$0xf]
    %v171 = vld [vmem:[#allocation6 + $0x150] sm:$0xf]
    %v172 = vld [vmem:[#allocation6 + $0x154] sm:$0xf]
    %v173 = vld [vmem:[#allocation6 + $0x158] sm:$0xf]
    %v174 = vld [vmem:[#allocation6 + $0x15c] sm:$0xf]
    %v175 = vld [vmem:[#allocation6 + $0x160] sm:$0xf]
    %v176 = vld [vmem:[#allocation6 + $0x164] sm:$0xf]
    %v177 = vld [vmem:[#allocation6 + $0x168] sm:$0xf]
    %v178 = vld [vmem:[#allocation6 + $0x16c] sm:$0xf]
    %v179 = vld [vmem:[#allocation6 + $0x170] sm:$0xf]
    %v180 = vld [vmem:[#allocation6 + $0x174] sm:$0xf]
    %v181 = vld [vmem:[#allocation6 + $0x178] sm:$0xf]
    %v182 = vld [vmem:[#allocation6 + $0x17c] sm:$0xf]
    %v183 = vld [vmem:[#allocation6 + $0x180] sm:$0xf]
    %v184 = vld [vmem:[#allocation6 + $0x184] sm:$0xf]
    %v185 = vld [vmem:[#allocation6 + $0x188] sm:$0xf]
    %v186 = vld [vmem:[#allocation6 + $0x18c] sm:$0xf]
    %v187 = vld [vmem:[#allocation6 + $0x190] sm:$0xf]
    %v188 = vld [vmem:[#allocation6 + $0x194] sm:$0xf]
    %v189 = vld [vmem:[#allocation6 + $0x198] sm:$0xf]
    %v190 = vld [vmem:[#allocation6 + $0x19c] sm:$0xf]
    %v191 = vld [vmem:[#allocation6 + $0x1a0] sm:$0xf]
    %v192 = vld [vmem:[#allocation6 + $0x1a4] sm:$0xf]
    %v193 = vld [vmem:[#allocation6 + $0x1a8] sm:$0xf]
    %v194 = vld [vmem:[#allocation6 + $0x1ac] sm:$0xf]
    %v195 = vld [vmem:[#allocation6 + $0x1b0] sm:$0xf]
    %v196 = vld [vmem:[#allocation6 + $0x1b4] sm:$0xf]
    %v197 = vld [vmem:[#allocation6 + $0x1b8] sm:$0xf]
    %v198 = vld [vmem:[#allocation6 + $0x1bc] sm:$0xf]
    %v199 = vld [vmem:[#allocation6 + $0x1c0] sm:$0xf]
    %v200 = vld [vmem:[#allocation6 + $0x1c4] sm:$0xf]
    %v201 = vld [vmem:[#allocation6 + $0x1c8] sm:$0xf]
    %v202 = vld [vmem:[#allocation6 + $0x1cc] sm:$0xf]
    %v203 = vld [vmem:[#allocation6 + $0x1d0] sm:$0xf]
    %v204 = vld [vmem:[#allocation6 + $0x1d4] sm:$0xf]
    %v205 = vld [vmem:[#allocation6 + $0x1d8] sm:$0xf]
    %v206 = vld [vmem:[#allocation6 + $0x1dc] sm:$0xf]
    %v207 = vld [vmem:[#allocation6 + $0x1e0] sm:$0xf]
    %v208 = vld [vmem:[#allocation6 + $0x1e4] sm:$0xf]
    %v209 = vld [vmem:[#allocation6 + $0x1e8] sm:$0xf]
    %v210 = vld [vmem:[#allocation6 + $0x1ec] sm:$0xf]
    %v211 = vld [vmem:[#allocation6 + $0x1f0] sm:$0xf]
    %v212 = vld [vmem:[#allocation6 + $0x1f4] sm:$0xf]
    %v213 = vld [vmem:[#allocation6 + $0x1f8] sm:$0xf]
    %v214 = vld [vmem:[#allocation6 + $0x1fc] sm:$0xf]
    %v223 = vunpack.c.l.b16 %v79
    %v224 = vunpack.c.h.b16 %v79
    %v225 = vunpack.c.l.b16 %v80
    %v226 = vunpack.c.h.b16 %v80
    %v227 = vunpack.c.l.b16 %v81
    %v228 = vunpack.c.h.b16 %v81
    %v229 = vunpack.c.l.b16 %v82
    %v230 = vunpack.c.h.b16 %v82
    %v231 = vunpack.c.l.b16 %v83
    %v232 = vunpack.c.h.b16 %v83
    %v233 = vunpack.c.l.b16 %v84
    %v234 = vunpack.c.h.b16 %v84
    %v235 = vunpack.c.l.b16 %v85
    %v236 = vunpack.c.h.b16 %v85
    %v237 = vunpack.c.l.b16 %v86
    %v238 = vunpack.c.h.b16 %v86
    %v239 = vpack.c.b16 %v231, %v223
    %v240 = vpack.c.b16 %v232, %v224
    %v241 = vpack.c.b16 %v233, %v225
    %v242 = vpack.c.b16 %v234, %v226
    %v243 = vpack.c.b16 %v235, %v227
    %v244 = vpack.c.b16 %v236, %v228
    %v245 = vpack.c.b16 %v237, %v229
    %v246 = vpack.c.b16 %v238, %v230
    %v383 = vunpack.c.l.b16 %v87
    %v384 = vunpack.c.l.b16 %v88
    %v385 = vunpack.c.l.b16 %v89
    %v386 = vunpack.c.l.b16 %v90
    %v387 = vunpack.c.l.b16 %v91
    %v388 = vunpack.c.l.b16 %v92
    %v389 = vunpack.c.l.b16 %v93
    %v390 = vunpack.c.l.b16 %v94
    %v391 = vunpack.c.l.b16 %v95
    %v392 = vunpack.c.l.b16 %v96
    %v393 = vunpack.c.l.b16 %v97
    %v394 = vunpack.c.l.b16 %v98
    %v395 = vunpack.c.l.b16 %v99
    %v396 = vunpack.c.l.b16 %v100
    %v397 = vunpack.c.l.b16 %v101
    %v398 = vunpack.c.l.b16 %v102
    %v399 = vunpack.c.l.b16 %v103
    %v400 = vunpack.c.l.b16 %v104
    %v401 = vunpack.c.l.b16 %v105
    %v402 = vunpack.c.l.b16 %v106
    %v403 = vunpack.c.l.b16 %v107
    %v404 = vunpack.c.l.b16 %v108
    %v405 = vunpack.c.l.b16 %v109
    %v406 = vunpack.c.l.b16 %v110
    %v407 = vunpack.c.l.b16 %v111
    %v408 = vunpack.c.l.b16 %v112
    %v409 = vunpack.c.l.b16 %v113
    %v410 = vunpack.c.l.b16 %v114
    %v411 = vunpack.c.l.b16 %v115
    %v412 = vunpack.c.l.b16 %v116
    %v413 = vunpack.c.l.b16 %v117
    %v414 = vunpack.c.l.b16 %v118
    %v415 = vunpack.c.l.b16 %v119
    %v416 = vunpack.c.l.b16 %v120
    %v417 = vunpack.c.l.b16 %v121
    %v418 = vunpack.c.l.b16 %v122
    %v419 = vunpack.c.l.b16 %v123
    %v420 = vunpack.c.l.b16 %v124
    %v421 = vunpack.c.l.b16 %v125
    %v422 = vunpack.c.l.b16 %v126
    %v423 = vunpack.c.l.b16 %v127
    %v424 = vunpack.c.l.b16 %v128
    %v425 = vunpack.c.l.b16 %v129
    %v426 = vunpack.c.l.b16 %v130
    %v427 = vunpack.c.l.b16 %v131
    %v428 = vunpack.c.l.b16 %v132
    %v429 = vunpack.c.l.b16 %v133
    %v430 = vunpack.c.l.b16 %v134
    %v431 = vunpack.c.l.b16 %v135
    %v432 = vunpack.c.l.b16 %v136
    %v433 = vunpack.c.l.b16 %v137
    %v434 = vunpack.c.l.b16 %v138
    %v435 = vunpack.c.l.b16 %v139
    %v436 = vunpack.c.l.b16 %v140
    %v437 = vunpack.c.l.b16 %v141
    %v438 = vunpack.c.l.b16 %v142
    %v439 = vunpack.c.l.b16 %v143
    %v440 = vunpack.c.l.b16 %v144
    %v441 = vunpack.c.l.b16 %v145
    %v442 = vunpack.c.l.b16 %v146
    %v443 = vunpack.c.l.b16 %v147
    %v444 = vunpack.c.l.b16 %v148
    %v445 = vunpack.c.l.b16 %v149
    %v446 = vunpack.c.l.b16 %v150
    %v447 = vunpack.c.l.b16 %v151
    %v448 = vunpack.c.l.b16 %v152
    %v449 = vunpack.c.l.b16 %v153
    %v450 = vunpack.c.l.b16 %v154
    %v451 = vunpack.c.l.b16 %v155
    %v452 = vunpack.c.l.b16 %v156
    %v453 = vunpack.c.l.b16 %v157
    %v454 = vunpack.c.l.b16 %v158
    %v455 = vunpack.c.l.b16 %v159
    %v456 = vunpack.c.l.b16 %v160
    %v457 = vunpack.c.l.b16 %v161
    %v458 = vunpack.c.l.b16 %v162
    %v459 = vunpack.c.l.b16 %v163
    %v460 = vunpack.c.l.b16 %v164
    %v461 = vunpack.c.l.b16 %v165
    %v462 = vunpack.c.l.b16 %v166
    %v463 = vunpack.c.l.b16 %v167
    %v464 = vunpack.c.l.b16 %v168
    %v465 = vunpack.c.l.b16 %v169
    %v466 = vunpack.c.l.b16 %v170
    %v467 = vunpack.c.l.b16 %v171
    %v468 = vunpack.c.l.b16 %v172
    %v469 = vunpack.c.l.b16 %v173
    %v470 = vunpack.c.l.b16 %v174
    %v471 = vunpack.c.l.b16 %v175
    %v472 = vunpack.c.l.b16 %v176
    %v473 = vunpack.c.l.b16 %v177
    %v474 = vunpack.c.l.b16 %v178
    %v475 = vunpack.c.l.b16 %v179
    %v476 = vunpack.c.l.b16 %v180
    %v477 = vunpack.c.l.b16 %v181
    %v478 = vunpack.c.l.b16 %v182
    %v479 = vunpack.c.l.b16 %v183
    %v480 = vunpack.c.l.b16 %v184
    %v481 = vunpack.c.l.b16 %v185
    %v482 = vunpack.c.l.b16 %v186
    %v483 = vunpack.c.l.b16 %v187
    %v484 = vunpack.c.l.b16 %v188
    %v485 = vunpack.c.l.b16 %v189
    %v486 = vunpack.c.l.b16 %v190
    %v487 = vunpack.c.l.b16 %v191
    %v488 = vunpack.c.l.b16 %v192
    %v489 = vunpack.c.l.b16 %v193
    %v490 = vunpack.c.l.b16 %v194
    %v491 = vunpack.c.l.b16 %v195
    %v492 = vunpack.c.l.b16 %v196
    %v493 = vunpack.c.l.b16 %v197
    %v494 = vunpack.c.l.b16 %v198
    %v495 = vunpack.c.l.b16 %v199
    %v496 = vunpack.c.l.b16 %v200
    %v497 = vunpack.c.l.b16 %v201
    %v498 = vunpack.c.l.b16 %v202
    %v499 = vunpack.c.l.b16 %v203
    %v500 = vunpack.c.l.b16 %v204
    %v501 = vunpack.c.l.b16 %v205
    %v502 = vunpack.c.l.b16 %v206
    %v503 = vunpack.c.l.b16 %v207
    %v504 = vunpack.c.l.b16 %v208
    %v505 = vunpack.c.l.b16 %v209
    %v506 = vunpack.c.l.b16 %v210
    %v507 = vunpack.c.l.b16 %v211
    %v508 = vunpack.c.l.b16 %v212
    %v509 = vunpack.c.l.b16 %v213
    %v510 = vunpack.c.l.b16 %v214
    %v511 = vpack.c.b16 %v384, %v383
    %v512 = vpack.c.b16 %v386, %v385
    %v513 = vpack.c.b16 %v388, %v387
    %v514 = vpack.c.b16 %v390, %v389
    %v515 = vpack.c.b16 %v392, %v391
    %v516 = vpack.c.b16 %v394, %v393
    %v517 = vpack.c.b16 %v396, %v395
    %v518 = vpack.c.b16 %v398, %v397
    %v519 = vpack.c.b16 %v400, %v399
    %v520 = vpack.c.b16 %v402, %v401
    %v521 = vpack.c.b16 %v404, %v403
    %v522 = vpack.c.b16 %v406, %v405
    %v523 = vpack.c.b16 %v408, %v407
    %v524 = vpack.c.b16 %v410, %v409
    %v525 = vpack.c.b16 %v412, %v411
    %v526 = vpack.c.b16 %v414, %v413
    %v527 = vpack.c.b16 %v416, %v415
    %v528 = vpack.c.b16 %v418, %v417
    %v529 = vpack.c.b16 %v420, %v419
    %v530 = vpack.c.b16 %v422, %v421
    %v531 = vpack.c.b16 %v424, %v423
    %v532 = vpack.c.b16 %v426, %v425
    %v533 = vpack.c.b16 %v428, %v427
    %v534 = vpack.c.b16 %v430, %v429
    %v535 = vpack.c.b16 %v432, %v431
    %v536 = vpack.c.b16 %v434, %v433
    %v537 = vpack.c.b16 %v436, %v435
    %v538 = vpack.c.b16 %v438, %v437
    %v539 = vpack.c.b16 %v440, %v439
    %v540 = vpack.c.b16 %v442, %v441
    %v541 = vpack.c.b16 %v444, %v443
    %v542 = vpack.c.b16 %v446, %v445
    %v543 = vpack.c.b16 %v448, %v447
    %v544 = vpack.c.b16 %v450, %v449
    %v545 = vpack.c.b16 %v452, %v451
    %v546 = vpack.c.b16 %v454, %v453
    %v547 = vpack.c.b16 %v456, %v455
    %v548 = vpack.c.b16 %v458, %v457
    %v549 = vpack.c.b16 %v460, %v459
    %v550 = vpack.c.b16 %v462, %v461
    %v551 = vpack.c.b16 %v464, %v463
    %v552 = vpack.c.b16 %v466, %v465
    %v553 = vpack.c.b16 %v468, %v467
    %v554 = vpack.c.b16 %v470, %v469
    %v555 = vpack.c.b16 %v472, %v471
    %v556 = vpack.c.b16 %v474, %v473
    %v557 = vpack.c.b16 %v476, %v475
    %v558 = vpack.c.b16 %v478, %v477
    %v559 = vpack.c.b16 %v480, %v479
    %v560 = vpack.c.b16 %v482, %v481
    %v561 = vpack.c.b16 %v484, %v483
    %v562 = vpack.c.b16 %v486, %v485
    %v563 = vpack.c.b16 %v488, %v487
    %v564 = vpack.c.b16 %v490, %v489
    %v565 = vpack.c.b16 %v492, %v491
    %v566 = vpack.c.b16 %v494, %v493
    %v567 = vpack.c.b16 %v496, %v495
    %v568 = vpack.c.b16 %v498, %v497
    %v569 = vpack.c.b16 %v500, %v499
    %v570 = vpack.c.b16 %v502, %v501
    %v571 = vpack.c.b16 %v504, %v503
    %v572 = vpack.c.b16 %v506, %v505
    %v573 = vpack.c.b16 %v508, %v507
    %v574 = vpack.c.b16 %v510, %v509
    %639 = vmatprep.subr.bf16.mxu0 0
    %640 = vmatpush1.bf16.msra.mxu0 %v511
    %641 = vmatprep.subr.bf16.mxu0 0
    %642 = vmatpush1.bf16.msra.mxu0 %v512
    %643 = vmatprep.subr.bf16.mxu0 0
    %644 = vmatpush1.bf16.msra.mxu0 %v513
    %645 = vmatprep.subr.bf16.mxu0 0
    %646 = vmatpush1.bf16.msra.mxu0 %v514
    %647 = vmatprep.subr.bf16.mxu0 0
    %648 = vmatpush1.bf16.msra.mxu0 %v515
    %649 = vmatprep.subr.bf16.mxu0 0
    %650 = vmatpush1.bf16.msra.mxu0 %v516
    %651 = vmatprep.subr.bf16.mxu0 0
    %652 = vmatpush1.bf16.msra.mxu0 %v517
    %653 = vmatprep.subr.bf16.mxu0 0
    %654 = vmatpush1.bf16.msra.mxu0 %v518
    %655 = vmatprep.subr.bf16.mxu0 0
    %656 = vmatpush1.bf16.msra.mxu0 %v519
    %657 = vmatprep.subr.bf16.mxu0 0
    %658 = vmatpush1.bf16.msra.mxu0 %v520
    %659 = vmatprep.subr.bf16.mxu0 0
    %660 = vmatpush1.bf16.msra.mxu0 %v521
    %661 = vmatprep.subr.bf16.mxu0 0
    %662 = vmatpush1.bf16.msra.mxu0 %v522
    %663 = vmatprep.subr.bf16.mxu0 0
    %664 = vmatpush1.bf16.msra.mxu0 %v523
    %665 = vmatprep.subr.bf16.mxu0 0
    %666 = vmatpush1.bf16.msra.mxu0 %v524
    %667 = vmatprep.subr.bf16.mxu0 0
    %668 = vmatpush1.bf16.msra.mxu0 %v525
    %669 = vmatprep.subr.bf16.mxu0 0
    %670 = vmatpush1.bf16.msra.mxu0 %v526
    %671 = vmatprep.mubr.bf16.mxu0 %v240
    %672 = vmatmul.mubr.bf16.gmra.mrb[0].mxu0 %v239
    %v673 = vpop.f32.mrb[0].mxu0
    %v674 = vadd.f32 0.0, %v673
    %v675 = vpop.f32.mrb[0].mxu0
    %v676 = vpop.f32.mrb[0].mxu0
    %v677 = vadd.f32 0.0, %v676
    %v678 = vpop.f32.mrb[0].mxu0
    %679 = vdwg.mxu0
    %680 = vmatprep.subr.bf16.mxu0 0
    %681 = vmatpush1.bf16.msra.mxu0 %v527
    %682 = vmatprep.subr.bf16.mxu0 0
    %683 = vmatpush1.bf16.msra.mxu0 %v528
    %684 = vmatprep.subr.bf16.mxu0 0
    %685 = vmatpush1.bf16.msra.mxu0 %v529
    %686 = vmatprep.subr.bf16.mxu0 0
    %687 = vmatpush1.bf16.msra.mxu0 %v530
    %688 = vmatprep.subr.bf16.mxu0 0
    %689 = vmatpush1.bf16.msra.mxu0 %v531
    %690 = vmatprep.subr.bf16.mxu0 0
    %691 = vmatpush1.bf16.msra.mxu0 %v532
    %692 = vmatprep.subr.bf16.mxu0 0
    %693 = vmatpush1.bf16.msra.mxu0 %v533
    %694 = vmatprep.subr.bf16.mxu0 0
    %695 = vmatpush1.bf16.msra.mxu0 %v534
    %696 = vmatprep.subr.bf16.mxu0 0
    %697 = vmatpush1.bf16.msra.mxu0 %v535
    %698 = vmatprep.subr.bf16.mxu0 0
    %699 = vmatpush1.bf16.msra.mxu0 %v536
    %700 = vmatprep.subr.bf16.mxu0 0
    %701 = vmatpush1.bf16.msra.mxu0 %v537
    %702 = vmatprep.subr.bf16.mxu0 0
    %703 = vmatpush1.bf16.msra.mxu0 %v538
    %704 = vmatprep.subr.bf16.mxu0 0
    %705 = vmatpush1.bf16.msra.mxu0 %v539
    %706 = vmatprep.subr.bf16.mxu0 0
    %707 = vmatpush1.bf16.msra.mxu0 %v540
    %708 = vmatprep.subr.bf16.mxu0 0
    %709 = vmatpush1.bf16.msra.mxu0 %v541
    %710 = vmatprep.subr.bf16.mxu0 0
    %711 = vmatpush1.bf16.msra.mxu0 %v542
    %712 = vmatprep.mubr.bf16.mxu0 %v242
    %713 = vmatmul.mubr.bf16.gmra.mrb[0].mxu0 %v241
    %v714 = vpop.f32.mrb[0].mxu0
    %v715 = vadd.f32 %v674, %v714
    %v716 = vpop.f32.mrb[0].mxu0
    %v717 = vpop.f32.mrb[0].mxu0
    %v718 = vadd.f32 %v677, %v717
    %v719 = vpop.f32.mrb[0].mxu0
    %720 = vdwg.mxu0
    %721 = vmatprep.subr.bf16.mxu0 0
    %722 = vmatpush1.bf16.msra.mxu0 %v543
    %723 = vmatprep.subr.bf16.mxu0 0
    %724 = vmatpush1.bf16.msra.mxu0 %v544
    %725 = vmatprep.subr.bf16.mxu0 0
    %726 = vmatpush1.bf16.msra.mxu0 %v545
    %727 = vmatprep.subr.bf16.mxu0 0
    %728 = vmatpush1.bf16.msra.mxu0 %v546
    %729 = vmatprep.subr.bf16.mxu0 0
    %730 = vmatpush1.bf16.msra.mxu0 %v547
    %731 = vmatprep.subr.bf16.mxu0 0
    %732 = vmatpush1.bf16.msra.mxu0 %v548
    %733 = vmatprep.subr.bf16.mxu0 0
    %734 = vmatpush1.bf16.msra.mxu0 %v549
    %735 = vmatprep.subr.bf16.mxu0 0
    %736 = vmatpush1.bf16.msra.mxu0 %v550
    %737 = vmatprep.subr.bf16.mxu0 0
    %738 = vmatpush1.bf16.msra.mxu0 %v551
    %739 = vmatprep.subr.bf16.mxu0 0
    %740 = vmatpush1.bf16.msra.mxu0 %v552
    %741 = vmatprep.subr.bf16.mxu0 0
    %742 = vmatpush1.bf16.msra.mxu0 %v553
    %743 = vmatprep.subr.bf16.mxu0 0
    %744 = vmatpush1.bf16.msra.mxu0 %v554
    %745 = vmatprep.subr.bf16.mxu0 0
    %746 = vmatpush1.bf16.msra.mxu0 %v555
    %747 = vmatprep.subr.bf16.mxu0 0
    %748 = vmatpush1.bf16.msra.mxu0 %v556
    %749 = vmatprep.subr.bf16.mxu0 0
    %750 = vmatpush1.bf16.msra.mxu0 %v557
    %751 = vmatprep.subr.bf16.mxu0 0
    %752 = vmatpush1.bf16.msra.mxu0 %v558
    %753 = vmatprep.mubr.bf16.mxu0 %v244
    %754 = vmatmul.mubr.bf16.gmra.mrb[0].mxu0 %v243
    %v755 = vpop.f32.mrb[0].mxu0
    %v756 = vadd.f32 %v715, %v755
    %v757 = vpop.f32.mrb[0].mxu0
    %v758 = vpop.f32.mrb[0].mxu0
    %v759 = vadd.f32 %v718, %v758
    %v760 = vpop.f32.mrb[0].mxu0
    %761 = vdwg.mxu0
    %762 = vmatprep.subr.bf16.mxu0 0
    %763 = vmatpush1.bf16.msra.mxu0 %v559
    %764 = vmatprep.subr.bf16.mxu0 0
    %765 = vmatpush1.bf16.msra.mxu0 %v560
    %766 = vmatprep.subr.bf16.mxu0 0
    %767 = vmatpush1.bf16.msra.mxu0 %v561
    %768 = vmatprep.subr.bf16.mxu0 0
    %769 = vmatpush1.bf16.msra.mxu0 %v562
    %770 = vmatprep.subr.bf16.mxu0 0
    %771 = vmatpush1.bf16.msra.mxu0 %v563
    %772 = vmatprep.subr.bf16.mxu0 0
    %773 = vmatpush1.bf16.msra.mxu0 %v564
    %774 = vmatprep.subr.bf16.mxu0 0
    %775 = vmatpush1.bf16.msra.mxu0 %v565
    %776 = vmatprep.subr.bf16.mxu0 0
    %777 = vmatpush1.bf16.msra.mxu0 %v566
    %778 = vmatprep.subr.bf16.mxu0 0
    %779 = vmatpush1.bf16.msra.mxu0 %v567
    %780 = vmatprep.subr.bf16.mxu0 0
    %781 = vmatpush1.bf16.msra.mxu0 %v568
    %782 = vmatprep.subr.bf16.mxu0 0
    %783 = vmatpush1.bf16.msra.mxu0 %v569
    %784 = vmatprep.subr.bf16.mxu0 0
    %785 = vmatpush1.bf16.msra.mxu0 %v570
    %786 = vmatprep.subr.bf16.mxu0 0
    %787 = vmatpush1.bf16.msra.mxu0 %v571
    %788 = vmatprep.subr.bf16.mxu0 0
    %789 = vmatpush1.bf16.msra.mxu0 %v572
    %790 = vmatprep.subr.bf16.mxu0 0
    %791 = vmatpush1.bf16.msra.mxu0 %v573
    %792 = vmatprep.subr.bf16.mxu0 0
    %793 = vmatpush1.bf16.msra.mxu0 %v574
    %794 = vmatprep.mubr.bf16.mxu0 %v246
    %795 = vmatmul.mubr.bf16.gmra.mrb[0].mxu0 %v245
    %v796 = vpop.f32.mrb[0].mxu0
    %v797 = vadd.f32 %v756, %v796
    %v798 = vpop.f32.mrb[0].mxu0
    %v799 = vpop.f32.mrb[0].mxu0
    %v800 = vadd.f32 %v759, %v799
    %v801 = vpop.f32.mrb[0].mxu0
    %802 = vdwg.mxu0
    %v803 = vadd.f32 %v77, %v797
    %v804 = vadd.f32 %v78, %v800
    %805 = vst [vmem:[#allocation2] sm:$0xff] %v803
    %806 = vst [vmem:[#allocation2 + $0x8] sm:$0xff] %v804
    // Predicated region
    $region38: #{tpu_custom_call.1} parent=1 // pred_check
      %p807 = pneg %p63
    $region39: #{tpu_custom_call.1} parent=1 // pred_check_branch
      %809 = sbr.rel (%p807) target = $region41
    $region40: #{tpu_custom_call.1} parent=1 // pred_region
      %v810 = vld [vmem:[#allocation2] sm:$0xff]
      %v811 = vld [vmem:[#allocation2 + $0x8] sm:$0xff]
      %v812 = vmax.f32 %v810, 0.0
      %v813 = vmax.f32 %v811, 0.0
      %v814 = vpack.c.bf16 %v813, %v812
      %v815 = vld [vmem:[#allocation8] sm:$0xf]
      %v816 = vld [vmem:[#allocation8 + $0x4] sm:$0xf]
      %v817 = vld [vmem:[#allocation8 + $0x8] sm:$0xf]
      %v818 = vld [vmem:[#allocation8 + $0xc] sm:$0xf]
      %v819 = vld [vmem:[#allocation8 + $0x10] sm:$0xf]
      %v820 = vld [vmem:[#allocation8 + $0x14] sm:$0xf]
      %v821 = vld [vmem:[#allocation8 + $0x18] sm:$0xf]
      %v822 = vld [vmem:[#allocation8 + $0x1c] sm:$0xf]
      %v823 = vld [vmem:[#allocation8 + $0x20] sm:$0xf]
      %v824 = vld [vmem:[#allocation8 + $0x24] sm:$0xf]
      %v825 = vld [vmem:[#allocation8 + $0x28] sm:$0xf]
      %v826 = vld [vmem:[#allocation8 + $0x2c] sm:$0xf]
      %v827 = vld [vmem:[#allocation8 + $0x30] sm:$0xf]
      %v828 = vld [vmem:[#allocation8 + $0x34] sm:$0xf]
      %v829 = vld [vmem:[#allocation8 + $0x38] sm:$0xf]
      %v830 = vld [vmem:[#allocation8 + $0x3c] sm:$0xf]
      %v831 = vld [vmem:[%s4] sm:$0x1]
      %v833 = vlaneseq
      %v834 = vshrl.u32 %v833, 7
      %v835 = vsub.s32 0, %v834
      %v836 = vrot.slane %v831, %v835
      %v854 = vunpack.c.l.b16 %v815
      %v855 = vunpack.c.l.b16 %v816
      %v856 = vunpack.c.l.b16 %v817
      %v857 = vunpack.c.l.b16 %v818
      %v858 = vunpack.c.l.b16 %v819
      %v859 = vunpack.c.l.b16 %v820
      %v860 = vunpack.c.l.b16 %v821
      %v861 = vunpack.c.l.b16 %v822
      %v862 = vunpack.c.l.b16 %v823
      %v863 = vunpack.c.l.b16 %v824
      %v864 = vunpack.c.l.b16 %v825
      %v865 = vunpack.c.l.b16 %v826
      %v866 = vunpack.c.l.b16 %v827
      %v867 = vunpack.c.l.b16 %v828
      %v868 = vunpack.c.l.b16 %v829
      %v869 = vunpack.c.l.b16 %v830
      %v870 = vpack.c.b16 %v855, %v854
      %v871 = vpack.c.b16 %v857, %v856
      %v872 = vpack.c.b16 %v859, %v858
      %v873 = vpack.c.b16 %v861, %v860
      %v874 = vpack.c.b16 %v863, %v862
      %v875 = vpack.c.b16 %v865, %v864
      %v876 = vpack.c.b16 %v867, %v866
      %v877 = vpack.c.b16 %v869, %v868
      %886 = vmatprep.subr.bf16.mxu0 0
      %887 = vmatpush1.bf16.msra.mxu0 %v870
      %888 = vmatprep.subr.bf16.mxu0 0
      %889 = vmatpush1.bf16.msra.mxu0 %v871
      %890 = vmatprep.subr.bf16.mxu0 0
      %891 = vmatpush1.bf16.msra.mxu0 %v872
      %892 = vmatprep.subr.bf16.mxu0 0
      %893 = vmatpush1.bf16.msra.mxu0 %v873
      %894 = vmatprep.subr.bf16.mxu0 0
      %895 = vmatpush1.bf16.msra.mxu0 %v874
      %896 = vmatprep.subr.bf16.mxu0 0
      %897 = vmatpush1.bf16.msra.mxu0 %v875
      %898 = vmatprep.subr.bf16.mxu0 0
      %899 = vmatpush1.bf16.msra.mxu0 %v876
      %900 = vmatprep.subr.bf16.mxu0 0
      %901 = vmatpush1.bf16.msra.mxu0 %v877
      %902 = vmatprep.subr.bf16.mxu0 0
      %903 = vmatpush1.bf16.msra.mxu0 0
      %904 = vmatprep.subr.bf16.mxu0 0
      %905 = vmatpush1.bf16.msra.mxu0 0
      %906 = vmatprep.subr.bf16.mxu0 0
      %907 = vmatpush1.bf16.msra.mxu0 0
      %908 = vmatprep.subr.bf16.mxu0 0
      %909 = vmatpush1.bf16.msra.mxu0 0
      %910 = vmatprep.subr.bf16.mxu0 0
      %911 = vmatpush1.bf16.msra.mxu0 0
      %912 = vmatprep.subr.bf16.mxu0 0
      %913 = vmatpush1.bf16.msra.mxu0 0
      %914 = vmatprep.subr.bf16.mxu0 0
      %915 = vmatpush1.bf16.msra.mxu0 0
      %916 = vmatprep.subr.bf16.mxu0 0
      %917 = vmatpush1.bf16.msra.mxu0 0
      %918 = vmatprep.mubr.bf16.mxu0 0
      %919 = vmatmul.mubr.bf16.gmra.mrb[0].mxu0 %v814
      %v920 = vpop.f32.mrb[0].mxu0
      %v921 = vadd.f32 %v836, %v920
      %v922 = vpop.f32.mrb[0].mxu0
      %v923 = vpop.f32.mrb[0].mxu0
      %v924 = vadd.f32 %v836, %v923
      %v925 = vpop.f32.mrb[0].mxu0
      %926 = vdwg.mxu0
      %927 = vst [vmem:[#allocation9] sm:$0xff] %v921
      %928 = vst [vmem:[#allocation9 + $0x8] sm:$0xff] %v924
    $region41: #{tpu_custom_call.1} parent=1 // pred_fallthru
      _
    // Predicated region
    $region42: #{tpu_custom_call.1} parent=1 // pred_check
      _
    $region43: #{tpu_custom_call.1} parent=1 // pred_check_branch
      %930 = sbr.rel (0) target = $region45
    $region44: #{tpu_custom_call.1} parent=1 // pred_region
      %s932 = ssub.s32 256, 256
      %933 = vsyncadd [#allocation5], %s932
      %s934 = sshll.u32 [#allocation9], 4
      %s935 = int_to_ptr.vmem [resolvable:$true] %s934
      %940 = dma.vmem_to_hbm [thread:$0]  %s935, 256, %s5, [#allocation5], 128, 128, 8
    $region45: #{tpu_custom_call.1} parent=1 // pred_fallthru
      _
    // Predicated region
    $region46: #{tpu_custom_call.1} parent=1 // pred_check
      _
    $region47: #{tpu_custom_call.1} parent=1 // pred_check_branch
      %942 = sbr.rel (0) target = $region49
    $region48: #{tpu_custom_call.1} parent=1 // pred_region
      %943 = dma.done [#allocation5], 256
    $region49: #{tpu_custom_call.1} parent=1 // pred_fallthru
      _
    %944 = vsyncpa [#allocation4], 1
    %945 = vsyncpa [#allocation7], 1
    %946 = vsyncpa [#allocation5], 1

// kernel: tpu_custom_call.1
$region0: #{tpu_custom_call.1}
  #allocation0 [shape = 'u32[]', space=smem, size = 0x4, offset = 0x4, fixed_abs, tag = 'smem constant byte address 0x4 - core index']
  #allocation1 [shape = 'u32[144,128]{1,0:T(1,128)}', space=vmem, size = 0x12000, scoped, tag = 'internal scratch']
  #allocation2 [shape = 'f32[16,128]{1,0:T(8,128)}', space=vmem, size = 0x2000, scoped, tag = 'scratch operand']
  %s0 = inlined_call_operand.hbm [shape: bf16[16,1024], index: 0, kind: input, shape index: {}]
  %s1 = inlined_call_operand.hbm [shape: bf16[1024,128], index: 1, kind: input, shape index: {}]
  %s2 = inlined_call_operand.vmem [shape: f32[1,128], index: 2, kind: input, shape index: {}]
  %s3 = inlined_call_operand.hbm [shape: bf16[128,128], index: 3, kind: input, shape index: {}]
  %s4 = inlined_call_operand.vmem [shape: f32[1,128], index: 4, kind: input, shape index: {}]
  %s5 = inlined_call_operand.hbm [shape: f32[16,128], index: 5, kind: output, shape index: {}]
  %s6 = sld [smem:[#allocation0]]
  $region50: #{tpu_custom_call.1} parent=0
    _
  %s8 = ssub.s32 1, %s6
  %s9 = scalar_select 0, %s8, %s6
  $region1: #{tpu_custom_call.1} parent=0
    #allocation3 [shape = 'u8[32768]{0}', space=vmem, size = 0x8000, scoped, tag = 'input window, operand 0, single buffered']
    #allocation4 [shape = 's32[1]{0}', space=sflag, size = 0x4, scoped, tag = 'scoped memory for tpu_custom_call.1']
    #allocation5 [shape = 's32[1]{0}', space=sflag, size = 0x4, scoped, tag = 'scoped memory for tpu_custom_call.1']
    #allocation6 [shape = 'u8[262144]{0}', space=vmem, size = 0x40000, scoped, tag = 'input window, operand 1, single buffered']
    #allocation7 [shape = 's32[1]{0}', space=sflag, size = 0x4, scoped, tag = 'scoped memory for tpu_custom_call.1']
    #allocation8 [shape = 'u8[32768]{0}', space=vmem, size = 0x8000, scoped, tag = 'input window, operand 3, single buffered']
    #allocation9 [shape = 'u8[8192]{0}', space=vmem, size = 0x2000, scoped, tag = 'output window, operand 0, single buffered']
    %10 = vsyncpa [#allocation4], 0
    %11 = vsyncpa [#allocation7], 0
    %12 = vsyncpa [#allocation5], 0
    // Predicated region
    $region2: #{tpu_custom_call.1} parent=1 // pred_check
      _
    $region3: #{tpu_custom_call.1} parent=1 // pred_check_branch
      %14 = sbr.rel (0) target = $region5
    $region4: #{tpu_custom_call.1} parent=1 // pred_region
      %s16 = ssub.s32 1024, 1024
      %17 = vsyncadd [#allocation4], %s16
      %s18 = sshll.u32 [#allocation3], 4
      %s19 = int_to_ptr.vmem [resolvable:$true] %s18
      %24 = dma.hbm_to_vmem [thread:$0]  %s0, 1024, %s19, [#allocation4], 512, 512, 32
    $region5: #{tpu_custom_call.1} parent=1 // pred_fallthru
      _
    // Predicated region
    $region6: #{tpu_custom_call.1} parent=1 // pred_check
      _
    $region7: #{tpu_custom_call.1} parent=1 // pred_check_branch
      %26 = sbr.rel (0) target = $region9
    $region8: #{tpu_custom_call.1} parent=1 // pred_region
      %s28 = ssub.s32 8192, 8192
      %29 = vsyncadd [#allocation7], %s28
      %s30 = sshll.u32 [#allocation6], 4
      %s31 = int_to_ptr.vmem [resolvable:$true] %s30
      %36 = dma.hbm_to_vmem [thread:$0]  %s1, 8192, %s31, [#allocation7], 64, 64, 4
    $region9: #{tpu_custom_call.1} parent=1 // pred_fallthru
      _
    // Predicated region
    $region10: #{tpu_custom_call.1} parent=1 // pred_check
      _
    $region11: #{tpu_custom_call.1} parent=1 // pred_check_branch
      %38 = sbr.rel (0) target = $region13
    $region12: #{tpu_custom_call.1} parent=1 // pred_region
      _
    $region13: #{tpu_custom_call.1} parent=1 // pred_fallthru
      _
    // Predicated region
    $region14: #{tpu_custom_call.1} parent=1 // pred_check
      _
    $region15: #{tpu_custom_call.1} parent=1 // pred_check_branch
      %40 = sbr.rel (0) target = $region17
    $region16: #{tpu_custom_call.1} parent=1 // pred_region
      %s42 = ssub.s32 1024, 1024
      %43 = vsyncadd [#allocation7], %s42
      %s44 = sshll.u32 [#allocation8], 4
      %s45 = int_to_ptr.vmem [resolvable:$true] %s44
      %50 = dma.hbm_to_vmem [thread:$0]  %s3, 1024, %s45, [#allocation7], 64, 64, 4
    $region17: #{tpu_custom_call.1} parent=1 // pred_fallthru
      _
    // Predicated region
    $region18: #{tpu_custom_call.1} parent=1 // pred_check
      _
    $region19: #{tpu_custom_call.1} parent=1 // pred_check_branch
      %52 = sbr.rel (0) target = $region21
    $region20: #{tpu_custom_call.1} parent=1 // pred_region
      _
    $region21: #{tpu_custom_call.1} parent=1 // pred_fallthru
      _
    // Predicated region
    $region22: #{tpu_custom_call.1} parent=1 // pred_check
      _
    $region23: #{tpu_custom_call.1} parent=1 // pred_check_branch
      %54 = sbr.rel (0) target = $region25
    $region24: #{tpu_custom_call.1} parent=1 // pred_region
      %55 = dma.done [#allocation4], 1024
    $region25: #{tpu_custom_call.1} parent=1 // pred_fallthru
      _
    // Predicated region
    $region26: #{tpu_custom_call.1} parent=1 // pred_check
      _
    $region27: #{tpu_custom_call.1} parent=1 // pred_check_branch
      %57 = sbr.rel (0) target = $region29
    $region28: #{tpu_custom_call.1} parent=1 // pred_region
      %58 = dma.done [#allocation7], 8192
    $region29: #{tpu_custom_call.1} parent=1 // pred_fallthru
      _
    // Predicated region
    $region30: #{tpu_custom_call.1} parent=1 // pred_check
      _
    $region31: #{tpu_custom_call.1} parent=1 // pred_check_branch
      %60 = sbr.rel (0) target = $region33
    $region32: #{tpu_custom_call.1} parent=1 // pred_region
      %61 = dma.done [#allocation7], 1024
    $region33: #{tpu_custom_call.1} parent=1 // pred_fallthru
      _
    %p63 = scmp.eq.s32.totalorder 0, 0
    // Predicated region
    $region34: #{tpu_custom_call.1} parent=1 // pred_check
      %p64 = pneg %p63
    $region35: #{tpu_custom_call.1} parent=1 // pred_check_branch
      %66 = sbr.rel (%p64) target = $region37
    $region36: #{tpu_custom_call.1} parent=1 // pred_region
      %v67 = vld [vmem:[%s2] sm:$0x1]
      %v69 = vlaneseq
      %v70 = vshrl.u32 %v69, 7
      %v71 = vsub.s32 0, %v70
      %v72 = vrot.slane %v67, %v71
      %v74 = vadd.f32 %v72, 0.0
      %75 = vst [vmem:[#allocation2] sm:$0xff] %v74
      %76 = vst [vmem:[#allocation2 + $0x8] sm:$0xff] %v74
    $region37: #{tpu_custom_call.1} parent=1 // pred_fallthru
      _
    %v77 = vld [vmem:[#allocation2] sm:$0xff]
    %v78 = vld [vmem:[#allocation2 + $0x8] sm:$0xff]
    %v79 = vld [vmem:[#allocation3] sm:$0xff]
    %v80 = vld [vmem:[#allocation3 + $0x8] sm:$0xff]
    %v81 = vld [vmem:[#allocation3 + $0x10] sm:$0xff]
    %v82 = vld [vmem:[#allocation3 + $0x18] sm:$0xff]
    %v83 = vld [vmem:[#allocation3 + $0x20] sm:$0xff]
    %v84 = vld [vmem:[#allocation3 + $0x28] sm:$0xff]
    %v85 = vld [vmem:[#allocation3 + $0x30] sm:$0xff]
    %v86 = vld [vmem:[#allocation3 + $0x38] sm:$0xff]
    %v87 = vld [vmem:[#allocation6] sm:$0xf]
    %v88 = vld [vmem:[#allocation6 + $0x4] sm:$0xf]
    %v89 = vld [vmem:[#allocation6 + $0x8] sm:$0xf]
    %v90 = vld [vmem:[#allocation6 + $0xc] sm:$0xf]
    %v91 = vld [vmem:[#allocation6 + $0x10] sm:$0xf]
    %v92 = vld [vmem:[#allocation6 + $0x14] sm:$0xf]
    %v93 = vld [vmem:[#allocation6 + $0x18] sm:$0xf]
    %v94 = vld [vmem:[#allocation6 + $0x1c] sm:$0xf]
    %v95 = vld [vmem:[#allocation6 + $0x20] sm:$0xf]
    %v96 = vld [vmem:[#allocation6 + $0x24] sm:$0xf]
    %v97 = vld [vmem:[#allocation6 + $0x28] sm:$0xf]
    %v98 = vld [vmem:[#allocation6 + $0x2c] sm:$0xf]
    %v99 = vld [vmem:[#allocation6 + $0x30] sm:$0xf]
    %v100 = vld [vmem:[#allocation6 + $0x34] sm:$0xf]
    %v101 = vld [vmem:[#allocation6 + $0x38] sm:$0xf]
    %v102 = vld [vmem:[#allocation6 + $0x3c] sm:$0xf]
    %v103 = vld [vmem:[#allocation6 + $0x40] sm:$0xf]
    %v104 = vld [vmem:[#allocation6 + $0x44] sm:$0xf]
    %v105 = vld [vmem:[#allocation6 + $0x48] sm:$0xf]
    %v106 = vld [vmem:[#allocation6 + $0x4c] sm:$0xf]
    %v107 = vld [vmem:[#allocation6 + $0x50] sm:$0xf]
    %v108 = vld [vmem:[#allocation6 + $0x54] sm:$0xf]
    %v109 = vld [vmem:[#allocation6 + $0x58] sm:$0xf]
    %v110 = vld [vmem:[#allocation6 + $0x5c] sm:$0xf]
    %v111 = vld [vmem:[#allocation6 + $0x60] sm:$0xf]
    %v112 = vld [vmem:[#allocation6 + $0x64] sm:$0xf]
    %v113 = vld [vmem:[#allocation6 + $0x68] sm:$0xf]
    %v114 = vld [vmem:[#allocation6 + $0x6c] sm:$0xf]
    %v115 = vld [vmem:[#allocation6 + $0x70] sm:$0xf]
    %v116 = vld [vmem:[#allocation6 + $0x74] sm:$0xf]
    %v117 = vld [vmem:[#allocation6 + $0x78] sm:$0xf]
    %v118 = vld [vmem:[#allocation6 + $0x7c] sm:$0xf]
    %v119 = vld [vmem:[#allocation6 + $0x80] sm:$0xf]
    %v120 = vld [vmem:[#allocation6 + $0x84] sm:$0xf]
    %v121 = vld [vmem:[#allocation6 + $0x88] sm:$0xf]
    %v122 = vld [vmem:[#allocation6 + $0x8c] sm:$0xf]
    %v123 = vld [vmem:[#allocation6 + $0x90] sm:$0xf]
    %v124 = vld [vmem:[#allocation6 + $0x94] sm:$0xf]
    %v125 = vld [vmem:[#allocation6 + $0x98] sm:$0xf]
    %v126 = vld [vmem:[#allocation6 + $0x9c] sm:$0xf]
    %v127 = vld [vmem:[#allocation6 + $0xa0] sm:$0xf]
    %v128 = vld [vmem:[#allocation6 + $0xa4] sm:$0xf]
    %v129 = vld [vmem:[#allocation6 + $0xa8] sm:$0xf]
    %v130 = vld [vmem:[#allocation6 + $0xac] sm:$0xf]
    %v131 = vld [vmem:[#allocation6 + $0xb0] sm:$0xf]
    %v132 = vld [vmem:[#allocation6 + $0xb4] sm:$0xf]
    %v133 = vld [vmem:[#allocation6 + $0xb8] sm:$0xf]
    %v134 = vld [vmem:[#allocation6 + $0xbc] sm:$0xf]
    %v135 = vld [vmem:[#allocation6 + $0xc0] sm:$0xf]
    %v136 = vld [vmem:[#allocation6 + $0xc4] sm:$0xf]
    %v137 = vld [vmem:[#allocation6 + $0xc8] sm:$0xf]
    %v138 = vld [vmem:[#allocation6 + $0xcc] sm:$0xf]
    %v139 = vld [vmem:[#allocation6 + $0xd0] sm:$0xf]
    %v140 = vld [vmem:[#allocation6 + $0xd4] sm:$0xf]
    %v141 = vld [vmem:[#allocation6 + $0xd8] sm:$0xf]
    %v142 = vld [vmem:[#allocation6 + $0xdc] sm:$0xf]
    %v143 = vld [vmem:[#allocation6 + $0xe0] sm:$0xf]
    %v144 = vld [vmem:[#allocation6 + $0xe4] sm:$0xf]
    %v145 = vld [vmem:[#allocation6 + $0xe8] sm:$0xf]
    %v146 = vld [vmem:[#allocation6 + $0xec] sm:$0xf]
    %v147 = vld [vmem:[#allocation6 + $0xf0] sm:$0xf]
    %v148 = vld [vmem:[#allocation6 + $0xf4] sm:$0xf]
    %v149 = vld [vmem:[#allocation6 + $0xf8] sm:$0xf]
    %v150 = vld [vmem:[#allocation6 + $0xfc] sm:$0xf]
    %v151 = vld [vmem:[#allocation6 + $0x100] sm:$0xf]
    %v152 = vld [vmem:[#allocation6 + $0x104] sm:$0xf]
    %v153 = vld [vmem:[#allocation6 + $0x108] sm:$0xf]
    %v154 = vld [vmem:[#allocation6 + $0x10c] sm:$0xf]
    %v155 = vld [vmem:[#allocation6 + $0x110] sm:$0xf]
    %v156 = vld [vmem:[#allocation6 + $0x114] sm:$0xf]
    %v157 = vld [vmem:[#allocation6 + $0x118] sm:$0xf]
    %v158 = vld [vmem:[#allocation6 + $0x11c] sm:$0xf]
    %v159 = vld [vmem:[#allocation6 + $0x120] sm:$0xf]
    %v160 = vld [vmem:[#allocation6 + $0x124] sm:$0xf]
    %v161 = vld [vmem:[#allocation6 + $0x128] sm:$0xf]
    %v162 = vld [vmem:[#allocation6 + $0x12c] sm:$0xf]
    %v163 = vld [vmem:[#allocation6 + $0x130] sm:$0xf]
    %v164 = vld [vmem:[#allocation6 + $0x134] sm:$0xf]
    %v165 = vld [vmem:[#allocation6 + $0x138] sm:$0xf]
    %v166 = vld [vmem:[#allocation6 + $0x13c] sm:$0xf]
    %v167 = vld [vmem:[#allocation6 + $0x140] sm:$0xf]
    %v168 = vld [vmem:[#allocation6 + $0x144] sm:$0xf]
    %v169 = vld [vmem:[#allocation6 + $0x148] sm:$0xf]
    %v170 = vld [vmem:[#allocation6 + $0x14c] sm:$0xf]
    %v171 = vld [vmem:[#allocation6 + $0x150] sm:$0xf]
    %v172 = vld [vmem:[#allocation6 + $0x154] sm:$0xf]
    %v173 = vld [vmem:[#allocation6 + $0x158] sm:$0xf]
    %v174 = vld [vmem:[#allocation6 + $0x15c] sm:$0xf]
    %v175 = vld [vmem:[#allocation6 + $0x160] sm:$0xf]
    %v176 = vld [vmem:[#allocation6 + $0x164] sm:$0xf]
    %v177 = vld [vmem:[#allocation6 + $0x168] sm:$0xf]
    %v178 = vld [vmem:[#allocation6 + $0x16c] sm:$0xf]
    %v179 = vld [vmem:[#allocation6 + $0x170] sm:$0xf]
    %v180 = vld [vmem:[#allocation6 + $0x174] sm:$0xf]
    %v181 = vld [vmem:[#allocation6 + $0x178] sm:$0xf]
    %v182 = vld [vmem:[#allocation6 + $0x17c] sm:$0xf]
    %v183 = vld [vmem:[#allocation6 + $0x180] sm:$0xf]
    %v184 = vld [vmem:[#allocation6 + $0x184] sm:$0xf]
    %v185 = vld [vmem:[#allocation6 + $0x188] sm:$0xf]
    %v186 = vld [vmem:[#allocation6 + $0x18c] sm:$0xf]
    %v187 = vld [vmem:[#allocation6 + $0x190] sm:$0xf]
    %v188 = vld [vmem:[#allocation6 + $0x194] sm:$0xf]
    %v189 = vld [vmem:[#allocation6 + $0x198] sm:$0xf]
    %v190 = vld [vmem:[#allocation6 + $0x19c] sm:$0xf]
    %v191 = vld [vmem:[#allocation6 + $0x1a0] sm:$0xf]
    %v192 = vld [vmem:[#allocation6 + $0x1a4] sm:$0xf]
    %v193 = vld [vmem:[#allocation6 + $0x1a8] sm:$0xf]
    %v194 = vld [vmem:[#allocation6 + $0x1ac] sm:$0xf]
    %v195 = vld [vmem:[#allocation6 + $0x1b0] sm:$0xf]
    %v196 = vld [vmem:[#allocation6 + $0x1b4] sm:$0xf]
    %v197 = vld [vmem:[#allocation6 + $0x1b8] sm:$0xf]
    %v198 = vld [vmem:[#allocation6 + $0x1bc] sm:$0xf]
    %v199 = vld [vmem:[#allocation6 + $0x1c0] sm:$0xf]
    %v200 = vld [vmem:[#allocation6 + $0x1c4] sm:$0xf]
    %v201 = vld [vmem:[#allocation6 + $0x1c8] sm:$0xf]
    %v202 = vld [vmem:[#allocation6 + $0x1cc] sm:$0xf]
    %v203 = vld [vmem:[#allocation6 + $0x1d0] sm:$0xf]
    %v204 = vld [vmem:[#allocation6 + $0x1d4] sm:$0xf]
    %v205 = vld [vmem:[#allocation6 + $0x1d8] sm:$0xf]
    %v206 = vld [vmem:[#allocation6 + $0x1dc] sm:$0xf]
    %v207 = vld [vmem:[#allocation6 + $0x1e0] sm:$0xf]
    %v208 = vld [vmem:[#allocation6 + $0x1e4] sm:$0xf]
    %v209 = vld [vmem:[#allocation6 + $0x1e8] sm:$0xf]
    %v210 = vld [vmem:[#allocation6 + $0x1ec] sm:$0xf]
    %v211 = vld [vmem:[#allocation6 + $0x1f0] sm:$0xf]
    %v212 = vld [vmem:[#allocation6 + $0x1f4] sm:$0xf]
    %v213 = vld [vmem:[#allocation6 + $0x1f8] sm:$0xf]
    %v214 = vld [vmem:[#allocation6 + $0x1fc] sm:$0xf]
    %v223 = vunpack.c.l.b16 %v79
    %v224 = vunpack.c.h.b16 %v79
    %v225 = vunpack.c.l.b16 %v80
    %v226 = vunpack.c.h.b16 %v80
    %v227 = vunpack.c.l.b16 %v81
    %v228 = vunpack.c.h.b16 %v81
    %v229 = vunpack.c.l.b16 %v82
    %v230 = vunpack.c.h.b16 %v82
    %v231 = vunpack.c.l.b16 %v83
    %v232 = vunpack.c.h.b16 %v83
    %v233 = vunpack.c.l.b16 %v84
    %v234 = vunpack.c.h.b16 %v84
    %v235 = vunpack.c.l.b16 %v85
    %v236 = vunpack.c.h.b16 %v85
    %v237 = vunpack.c.l.b16 %v86
    %v238 = vunpack.c.h.b16 %v86
    %v239 = vpack.c.b16 %v231, %v223
    %v240 = vpack.c.b16 %v232, %v224
    %v241 = vpack.c.b16 %v233, %v225
    %v242 = vpack.c.b16 %v234, %v226
    %v243 = vpack.c.b16 %v235, %v227
    %v244 = vpack.c.b16 %v236, %v228
    %v245 = vpack.c.b16 %v237, %v229
    %v246 = vpack.c.b16 %v238, %v230
    %v383 = vunpack.c.l.b16 %v87
    %v384 = vunpack.c.l.b16 %v88
    %v385 = vunpack.c.l.b16 %v89
    %v386 = vunpack.c.l.b16 %v90
    %v387 = vunpack.c.l.b16 %v91
    %v388 = vunpack.c.l.b16 %v92
    %v389 = vunpack.c.l.b16 %v93
    %v390 = vunpack.c.l.b16 %v94
    %v391 = vunpack.c.l.b16 %v95
    %v392 = vunpack.c.l.b16 %v96
    %v393 = vunpack.c.l.b16 %v97
    %v394 = vunpack.c.l.b16 %v98
    %v395 = vunpack.c.l.b16 %v99
    %v396 = vunpack.c.l.b16 %v100
    %v397 = vunpack.c.l.b16 %v101
    %v398 = vunpack.c.l.b16 %v102
    %v399 = vunpack.c.l.b16 %v103
    %v400 = vunpack.c.l.b16 %v104
    %v401 = vunpack.c.l.b16 %v105
    %v402 = vunpack.c.l.b16 %v106
    %v403 = vunpack.c.l.b16 %v107
    %v404 = vunpack.c.l.b16 %v108
    %v405 = vunpack.c.l.b16 %v109
    %v406 = vunpack.c.l.b16 %v110
    %v407 = vunpack.c.l.b16 %v111
    %v408 = vunpack.c.l.b16 %v112
    %v409 = vunpack.c.l.b16 %v113
    %v410 = vunpack.c.l.b16 %v114
    %v411 = vunpack.c.l.b16 %v115
    %v412 = vunpack.c.l.b16 %v116
    %v413 = vunpack.c.l.b16 %v117
    %v414 = vunpack.c.l.b16 %v118
    %v415 = vunpack.c.l.b16 %v119
    %v416 = vunpack.c.l.b16 %v120
    %v417 = vunpack.c.l.b16 %v121
    %v418 = vunpack.c.l.b16 %v122
    %v419 = vunpack.c.l.b16 %v123
    %v420 = vunpack.c.l.b16 %v124
    %v421 = vunpack.c.l.b16 %v125
    %v422 = vunpack.c.l.b16 %v126
    %v423 = vunpack.c.l.b16 %v127
    %v424 = vunpack.c.l.b16 %v128
    %v425 = vunpack.c.l.b16 %v129
    %v426 = vunpack.c.l.b16 %v130
    %v427 = vunpack.c.l.b16 %v131
    %v428 = vunpack.c.l.b16 %v132
    %v429 = vunpack.c.l.b16 %v133
    %v430 = vunpack.c.l.b16 %v134
    %v431 = vunpack.c.l.b16 %v135
    %v432 = vunpack.c.l.b16 %v136
    %v433 = vunpack.c.l.b16 %v137
    %v434 = vunpack.c.l.b16 %v138
    %v435 = vunpack.c.l.b16 %v139
    %v436 = vunpack.c.l.b16 %v140
    %v437 = vunpack.c.l.b16 %v141
    %v438 = vunpack.c.l.b16 %v142
    %v439 = vunpack.c.l.b16 %v143
    %v440 = vunpack.c.l.b16 %v144
    %v441 = vunpack.c.l.b16 %v145
    %v442 = vunpack.c.l.b16 %v146
    %v443 = vunpack.c.l.b16 %v147
    %v444 = vunpack.c.l.b16 %v148
    %v445 = vunpack.c.l.b16 %v149
    %v446 = vunpack.c.l.b16 %v150
    %v447 = vunpack.c.l.b16 %v151
    %v448 = vunpack.c.l.b16 %v152
    %v449 = vunpack.c.l.b16 %v153
    %v450 = vunpack.c.l.b16 %v154
    %v451 = vunpack.c.l.b16 %v155
    %v452 = vunpack.c.l.b16 %v156
    %v453 = vunpack.c.l.b16 %v157
    %v454 = vunpack.c.l.b16 %v158
    %v455 = vunpack.c.l.b16 %v159
    %v456 = vunpack.c.l.b16 %v160
    %v457 = vunpack.c.l.b16 %v161
    %v458 = vunpack.c.l.b16 %v162
    %v459 = vunpack.c.l.b16 %v163
    %v460 = vunpack.c.l.b16 %v164
    %v461 = vunpack.c.l.b16 %v165
    %v462 = vunpack.c.l.b16 %v166
    %v463 = vunpack.c.l.b16 %v167
    %v464 = vunpack.c.l.b16 %v168
    %v465 = vunpack.c.l.b16 %v169
    %v466 = vunpack.c.l.b16 %v170
    %v467 = vunpack.c.l.b16 %v171
    %v468 = vunpack.c.l.b16 %v172
    %v469 = vunpack.c.l.b16 %v173
    %v470 = vunpack.c.l.b16 %v174
    %v471 = vunpack.c.l.b16 %v175
    %v472 = vunpack.c.l.b16 %v176
    %v473 = vunpack.c.l.b16 %v177
    %v474 = vunpack.c.l.b16 %v178
    %v475 = vunpack.c.l.b16 %v179
    %v476 = vunpack.c.l.b16 %v180
    %v477 = vunpack.c.l.b16 %v181
    %v478 = vunpack.c.l.b16 %v182
    %v479 = vunpack.c.l.b16 %v183
    %v480 = vunpack.c.l.b16 %v184
    %v481 = vunpack.c.l.b16 %v185
    %v482 = vunpack.c.l.b16 %v186
    %v483 = vunpack.c.l.b16 %v187
    %v484 = vunpack.c.l.b16 %v188
    %v485 = vunpack.c.l.b16 %v189
    %v486 = vunpack.c.l.b16 %v190
    %v487 = vunpack.c.l.b16 %v191
    %v488 = vunpack.c.l.b16 %v192
    %v489 = vunpack.c.l.b16 %v193
    %v490 = vunpack.c.l.b16 %v194
    %v491 = vunpack.c.l.b16 %v195
    %v492 = vunpack.c.l.b16 %v196
    %v493 = vunpack.c.l.b16 %v197
    %v494 = vunpack.c.l.b16 %v198
    %v495 = vunpack.c.l.b16 %v199
    %v496 = vunpack.c.l.b16 %v200
    %v497 = vunpack.c.l.b16 %v201
    %v498 = vunpack.c.l.b16 %v202
    %v499 = vunpack.c.l.b16 %v203
    %v500 = vunpack.c.l.b16 %v204
    %v501 = vunpack.c.l.b16 %v205
    %v502 = vunpack.c.l.b16 %v206
    %v503 = vunpack.c.l.b16 %v207
    %v504 = vunpack.c.l.b16 %v208
    %v505 = vunpack.c.l.b16 %v209
    %v506 = vunpack.c.l.b16 %v210
    %v507 = vunpack.c.l.b16 %v211
    %v508 = vunpack.c.l.b16 %v212
    %v509 = vunpack.c.l.b16 %v213
    %v510 = vunpack.c.l.b16 %v214
    %v511 = vpack.c.b16 %v384, %v383
    %v512 = vpack.c.b16 %v386, %v385
    %v513 = vpack.c.b16 %v388, %v387
    %v514 = vpack.c.b16 %v390, %v389
    %v515 = vpack.c.b16 %v392, %v391
    %v516 = vpack.c.b16 %v394, %v393
    %v517 = vpack.c.b16 %v396, %v395
    %v518 = vpack.c.b16 %v398, %v397
    %v519 = vpack.c.b16 %v400, %v399
    %v520 = vpack.c.b16 %v402, %v401
    %v521 = vpack.c.b16 %v404, %v403
    %v522 = vpack.c.b16 %v406, %v405
    %v523 = vpack.c.b16 %v408, %v407
    %v524 = vpack.c.b16 %v410, %v409
    %v525 = vpack.c.b16 %v412, %v411
    %v526 = vpack.c.b16 %v414, %v413
    %v527 = vpack.c.b16 %v416, %v415
    %v528 = vpack.c.b16 %v418, %v417
    %v529 = vpack.c.b16 %v420, %v419
    %v530 = vpack.c.b16 %v422, %v421
    %v531 = vpack.c.b16 %v424, %v423
    %v532 = vpack.c.b16 %v426, %v425
    %v533 = vpack.c.b16 %v428, %v427
    %v534 = vpack.c.b16 %v430, %v429
    %v535 = vpack.c.b16 %v432, %v431
    %v536 = vpack.c.b16 %v434, %v433
    %v537 = vpack.c.b16 %v436, %v435
    %v538 = vpack.c.b16 %v438, %v437
    %v539 = vpack.c.b16 %v440, %v439
    %v540 = vpack.c.b16 %v442, %v441
    %v541 = vpack.c.b16 %v444, %v443
    %v542 = vpack.c.b16 %v446, %v445
    %v543 = vpack.c.b16 %v448, %v447
    %v544 = vpack.c.b16 %v450, %v449
    %v545 = vpack.c.b16 %v452, %v451
    %v546 = vpack.c.b16 %v454, %v453
    %v547 = vpack.c.b16 %v456, %v455
    %v548 = vpack.c.b16 %v458, %v457
    %v549 = vpack.c.b16 %v460, %v459
    %v550 = vpack.c.b16 %v462, %v461
    %v551 = vpack.c.b16 %v464, %v463
    %v552 = vpack.c.b16 %v466, %v465
    %v553 = vpack.c.b16 %v468, %v467
    %v554 = vpack.c.b16 %v470, %v469
    %v555 = vpack.c.b16 %v472, %v471
    %v556 = vpack.c.b16 %v474, %v473
    %v557 = vpack.c.b16 %v476, %v475
    %v558 = vpack.c.b16 %v478, %v477
    %v559 = vpack.c.b16 %v480, %v479
    %v560 = vpack.c.b16 %v482, %v481
    %v561 = vpack.c.b16 %v484, %v483
    %v562 = vpack.c.b16 %v486, %v485
    %v563 = vpack.c.b16 %v488, %v487
    %v564 = vpack.c.b16 %v490, %v489
    %v565 = vpack.c.b16 %v492, %v491
    %v566 = vpack.c.b16 %v494, %v493
    %v567 = vpack.c.b16 %v496, %v495
    %v568 = vpack.c.b16 %v498, %v497
    %v569 = vpack.c.b16 %v500, %v499
    %v570 = vpack.c.b16 %v502, %v501
    %v571 = vpack.c.b16 %v504, %v503
    %v572 = vpack.c.b16 %v506, %v505
    %v573 = vpack.c.b16 %v508, %v507
    %v574 = vpack.c.b16 %v510, %v509
    %639 = vmatprep.subr.bf16.mxu0 0
    %640 = vmatpush1.bf16.msra.mxu0 %v511
    %641 = vmatprep.subr.bf16.mxu0 0
    %642 = vmatpush1.bf16.msra.mxu0 %v512
    %643 = vmatprep.subr.bf16.mxu0 0
    %644 = vmatpush1.bf16.msra.mxu0 %v513
    %645 = vmatprep.subr.bf16.mxu0 0
    %646 = vmatpush1.bf16.msra.mxu0 %v514
    %647 = vmatprep.subr.bf16.mxu0 0
    %648 = vmatpush1.bf16.msra.mxu0 %v515
    %649 = vmatprep.subr.bf16.mxu0 0
    %650 = vmatpush1.bf16.msra.mxu0 %v516
    %651 = vmatprep.subr.bf16.mxu0 0
    %652 = vmatpush1.bf16.msra.mxu0 %v517
    %653 = vmatprep.subr.bf16.mxu0 0
    %654 = vmatpush1.bf16.msra.mxu0 %v518
    %655 = vmatprep.subr.bf16.mxu0 0
    %656 = vmatpush1.bf16.msra.mxu0 %v519
    %657 = vmatprep.subr.bf16.mxu0 0
    %658 = vmatpush1.bf16.msra.mxu0 %v520
    %659 = vmatprep.subr.bf16.mxu0 0
    %660 = vmatpush1.bf16.msra.mxu0 %v521
    %661 = vmatprep.subr.bf16.mxu0 0
    %662 = vmatpush1.bf16.msra.mxu0 %v522
    %663 = vmatprep.subr.bf16.mxu0 0
    %664 = vmatpush1.bf16.msra.mxu0 %v523
    %665 = vmatprep.subr.bf16.mxu0 0
    %666 = vmatpush1.bf16.msra.mxu0 %v524
    %667 = vmatprep.subr.bf16.mxu0 0
    %668 = vmatpush1.bf16.msra.mxu0 %v525
    %669 = vmatprep.subr.bf16.mxu0 0
    %670 = vmatpush1.bf16.msra.mxu0 %v526
    %671 = vmatprep.mubr.bf16.mxu0 %v240
    %672 = vmatmul.mubr.bf16.gmra.mrb[0].mxu0 %v239
    %v673 = vpop.f32.mrb[0].mxu0
    %v674 = vadd.f32 0.0, %v673
    %v675 = vpop.f32.mrb[0].mxu0
    %v676 = vpop.f32.mrb[0].mxu0
    %v677 = vadd.f32 0.0, %v676
    %v678 = vpop.f32.mrb[0].mxu0
    %679 = vdwg.mxu0
    %680 = vmatprep.subr.bf16.mxu0 0
    %681 = vmatpush1.bf16.msra.mxu0 %v527
    %682 = vmatprep.subr.bf16.mxu0 0
    %683 = vmatpush1.bf16.msra.mxu0 %v528
    %684 = vmatprep.subr.bf16.mxu0 0
    %685 = vmatpush1.bf16.msra.mxu0 %v529
    %686 = vmatprep.subr.bf16.mxu0 0
    %687 = vmatpush1.bf16.msra.mxu0 %v530
    %688 = vmatprep.subr.bf16.mxu0 0
    %689 = vmatpush1.bf16.msra.mxu0 %v531
    %690 = vmatprep.subr.bf16.mxu0 0
    %691 = vmatpush1.bf16.msra.mxu0 %v532
    %692 = vmatprep.subr.bf16.mxu0 0
    %693 = vmatpush1.bf16.msra.mxu0 %v533
    %694 = vmatprep.subr.bf16.mxu0 0
    %695 = vmatpush1.bf16.msra.mxu0 %v534
    %696 = vmatprep.subr.bf16.mxu0 0
    %697 = vmatpush1.bf16.msra.mxu0 %v535
    %698 = vmatprep.subr.bf16.mxu0 0
    %699 = vmatpush1.bf16.msra.mxu0 %v536
    %700 = vmatprep.subr.bf16.mxu0 0
    %701 = vmatpush1.bf16.msra.mxu0 %v537
    %702 = vmatprep.subr.bf16.mxu0 0
    %703 = vmatpush1.bf16.msra.mxu0 %v538
    %704 = vmatprep.subr.bf16.mxu0 0
    %705 = vmatpush1.bf16.msra.mxu0 %v539
    %706 = vmatprep.subr.bf16.mxu0 0
    %707 = vmatpush1.bf16.msra.mxu0 %v540
    %708 = vmatprep.subr.bf16.mxu0 0
    %709 = vmatpush1.bf16.msra.mxu0 %v541
    %710 = vmatprep.subr.bf16.mxu0 0
    %711 = vmatpush1.bf16.msra.mxu0 %v542
    %712 = vmatprep.mubr.bf16.mxu0 %v242
    %713 = vmatmul.mubr.bf16.gmra.mrb[0].mxu0 %v241
    %v714 = vpop.f32.mrb[0].mxu0
    %v715 = vadd.f32 %v674, %v714
    %v716 = vpop.f32.mrb[0].mxu0
    %v717 = vpop.f32.mrb[0].mxu0
    %v718 = vadd.f32 %v677, %v717
    %v719 = vpop.f32.mrb[0].mxu0
    %720 = vdwg.mxu0
    %721 = vmatprep.subr.bf16.mxu0 0
    %722 = vmatpush1.bf16.msra.mxu0 %v543
    %723 = vmatprep.subr.bf16.mxu0 0
    %724 = vmatpush1.bf16.msra.mxu0 %v544
    %725 = vmatprep.subr.bf16.mxu0 0
    %726 = vmatpush1.bf16.msra.mxu0 %v545
    %727 = vmatprep.subr.bf16.mxu0 0
    %728 = vmatpush1.bf16.msra.mxu0 %v546
    %729 = vmatprep.subr.bf16.mxu0 0
    %730 = vmatpush1.bf16.msra.mxu0 %v547
    %731 = vmatprep.subr.bf16.mxu0 0
    %732 = vmatpush1.bf16.msra.mxu0 %v548
    %733 = vmatprep.subr.bf16.mxu0 0
    %734 = vmatpush1.bf16.msra.mxu0 %v549
    %735 = vmatprep.subr.bf16.mxu0 0
    %736 = vmatpush1.bf16.msra.mxu0 %v550
    %737 = vmatprep.subr.bf16.mxu0 0
    %738 = vmatpush1.bf16.msra.mxu0 %v551
    %739 = vmatprep.subr.bf16.mxu0 0
    %740 = vmatpush1.bf16.msra.mxu0 %v552
    %741 = vmatprep.subr.bf16.mxu0 0
    %742 = vmatpush1.bf16.msra.mxu0 %v553
    %743 = vmatprep.subr.bf16.mxu0 0
    %744 = vmatpush1.bf16.msra.mxu0 %v554
    %745 = vmatprep.subr.bf16.mxu0 0
    %746 = vmatpush1.bf16.msra.mxu0 %v555
    %747 = vmatprep.subr.bf16.mxu0 0
    %748 = vmatpush1.bf16.msra.mxu0 %v556
    %749 = vmatprep.subr.bf16.mxu0 0
    %750 = vmatpush1.bf16.msra.mxu0 %v557
    %751 = vmatprep.subr.bf16.mxu0 0
    %752 = vmatpush1.bf16.msra.mxu0 %v558
    %753 = vmatprep.mubr.bf16.mxu0 %v244
    %754 = vmatmul.mubr.bf16.gmra.mrb[0].mxu0 %v243
    %v755 = vpop.f32.mrb[0].mxu0
    %v756 = vadd.f32 %v715, %v755
    %v757 = vpop.f32.mrb[0].mxu0
    %v758 = vpop.f32.mrb[0].mxu0
    %v759 = vadd.f32 %v718, %v758
    %v760 = vpop.f32.mrb[0].mxu0
    %761 = vdwg.mxu0
    %762 = vmatprep.subr.bf16.mxu0 0
    %763 = vmatpush1.bf16.msra.mxu0 %v559
    %764 = vmatprep.subr.bf16.mxu0 0
    %765 = vmatpush1.bf16.msra.mxu0 %v560
    %766 = vmatprep.subr.bf16.mxu0 0
    %767 = vmatpush1.bf16.msra.mxu0 %v561
    %768 = vmatprep.subr.bf16.mxu0 0
    %769 = vmatpush1.bf16.msra.mxu0 %v562
    %770 = vmatprep.subr.bf16.mxu0 0
    %771 = vmatpush1.bf16.msra.mxu0 %v563
    %772 = vmatprep.subr.bf16.mxu0 0
    %773 = vmatpush1.bf16.msra.mxu0 %v564
    %774 = vmatprep.subr.bf16.mxu0 0
    %775 = vmatpush1.bf16.msra.mxu0 %v565
    %776 = vmatprep.subr.bf16.mxu0 0
    %777 = vmatpush1.bf16.msra.mxu0 %v566
    %778 = vmatprep.subr.bf16.mxu0 0
    %779 = vmatpush1.bf16.msra.mxu0 %v567
    %780 = vmatprep.subr.bf16.mxu0 0
    %781 = vmatpush1.bf16.msra.mxu0 %v568
    %782 = vmatprep.subr.bf16.mxu0 0
    %783 = vmatpush1.bf16.msra.mxu0 %v569
    %784 = vmatprep.subr.bf16.mxu0 0
    %785 = vmatpush1.bf16.msra.mxu0 %v570
    %786 = vmatprep.subr.bf16.mxu0 0
    %787 = vmatpush1.bf16.msra.mxu0 %v571
    %788 = vmatprep.subr.bf16.mxu0 0
    %789 = vmatpush1.bf16.msra.mxu0 %v572
    %790 = vmatprep.subr.bf16.mxu0 0
    %791 = vmatpush1.bf16.msra.mxu0 %v573
    %792 = vmatprep.subr.bf16.mxu0 0
    %793 = vmatpush1.bf16.msra.mxu0 %v574
    %794 = vmatprep.mubr.bf16.mxu0 %v246
    %795 = vmatmul.mubr.bf16.gmra.mrb[0].mxu0 %v245
    %v796 = vpop.f32.mrb[0].mxu0
    %v797 = vadd.f32 %v756, %v796
    %v798 = vpop.f32.mrb[0].mxu0
    %v799 = vpop.f32.mrb[0].mxu0
    %v800 = vadd.f32 %v759, %v799
    %v801 = vpop.f32.mrb[0].mxu0
    %802 = vdwg.mxu0
    %v803 = vadd.f32 %v77, %v797
    %v804 = vadd.f32 %v78, %v800
    %805 = vst [vmem:[#allocation2] sm:$0xff] %v803
    %806 = vst [vmem:[#allocation2 + $0x8] sm:$0xff] %v804
    // Predicated region
    $region38: #{tpu_custom_call.1} parent=1 // pred_check
      %p807 = pneg %p63
    $region39: #{tpu_custom_call.1} parent=1 // pred_check_branch
      %809 = sbr.rel (%p807) target = $region41
    $region40: #{tpu_custom_call.1} parent=1 // pred_region
      %v810 = vld [vmem:[#allocation2] sm:$0xff]
      %v811 = vld [vmem:[#allocation2 + $0x8] sm:$0xff]
      %v812 = vmax.f32 %v810, 0.0
      %v813 = vmax.f32 %v811, 0.0
      %v814 = vpack.c.bf16 %v813, %v812
      %v815 = vld [vmem:[#allocation8] sm:$0xf]
      %v816 = vld [vmem:[#allocation8 + $0x4] sm:$0xf]
      %v817 = vld [vmem:[#allocation8 + $0x8] sm:$0xf]
      %v818 = vld [vmem:[#allocation8 + $0xc] sm:$0xf]
      %v819 = vld [vmem:[#allocation8 + $0x10] sm:$0xf]
      %v820 = vld [vmem:[#allocation8 + $0x14] sm:$0xf]
      %v821 = vld [vmem:[#allocation8 + $0x18] sm:$0xf]
      %v822 = vld [vmem:[#allocation8 + $0x1c] sm:$0xf]
      %v823 = vld [vmem:[#allocation8 + $0x20] sm:$0xf]
      %v824 = vld [vmem:[#allocation8 + $0x24] sm:$0xf]
      %v825 = vld [vmem:[#allocation8 + $0x28] sm:$0xf]
      %v826 = vld [vmem:[#allocation8 + $0x2c] sm:$0xf]
      %v827 = vld [vmem:[#allocation8 + $0x30] sm:$0xf]
      %v828 = vld [vmem:[#allocation8 + $0x34] sm:$0xf]
      %v829 = vld [vmem:[#allocation8 + $0x38] sm:$0xf]
      %v830 = vld [vmem:[#allocation8 + $0x3c] sm:$0xf]
      %v831 = vld [vmem:[%s4] sm:$0x1]
      %v833 = vlaneseq
      %v834 = vshrl.u32 %v833, 7
      %v835 = vsub.s32 0, %v834
      %v836 = vrot.slane %v831, %v835
      %v854 = vunpack.c.l.b16 %v815
      %v855 = vunpack.c.l.b16 %v816
      %v856 = vunpack.c.l.b16 %v817
      %v857 = vunpack.c.l.b16 %v818
      %v858 = vunpack.c.l.b16 %v819
      %v859 = vunpack.c.l.b16 %v820
      %v860 = vunpack.c.l.b16 %v821
      %v861 = vunpack.c.l.b16 %v822
      %v862 = vunpack.c.l.b16 %v823
      %v863 = vunpack.c.l.b16 %v824
      %v864 = vunpack.c.l.b16 %v825
      %v865 = vunpack.c.l.b16 %v826
      %v866 = vunpack.c.l.b16 %v827
      %v867 = vunpack.c.l.b16 %v828
      %v868 = vunpack.c.l.b16 %v829
      %v869 = vunpack.c.l.b16 %v830
      %v870 = vpack.c.b16 %v855, %v854
      %v871 = vpack.c.b16 %v857, %v856
      %v872 = vpack.c.b16 %v859, %v858
      %v873 = vpack.c.b16 %v861, %v860
      %v874 = vpack.c.b16 %v863, %v862
      %v875 = vpack.c.b16 %v865, %v864
      %v876 = vpack.c.b16 %v867, %v866
      %v877 = vpack.c.b16 %v869, %v868
      %886 = vmatprep.subr.bf16.mxu0 0
      %887 = vmatpush1.bf16.msra.mxu0 %v870
      %888 = vmatprep.subr.bf16.mxu0 0
      %889 = vmatpush1.bf16.msra.mxu0 %v871
      %890 = vmatprep.subr.bf16.mxu0 0
      %891 = vmatpush1.bf16.msra.mxu0 %v872
      %892 = vmatprep.subr.bf16.mxu0 0
      %893 = vmatpush1.bf16.msra.mxu0 %v873
      %894 = vmatprep.subr.bf16.mxu0 0
      %895 = vmatpush1.bf16.msra.mxu0 %v874
      %896 = vmatprep.subr.bf16.mxu0 0
      %897 = vmatpush1.bf16.msra.mxu0 %v875
      %898 = vmatprep.subr.bf16.mxu0 0
      %899 = vmatpush1.bf16.msra.mxu0 %v876
      %900 = vmatprep.subr.bf16.mxu0 0
      %901 = vmatpush1.bf16.msra.mxu0 %v877
      %902 = vmatprep.subr.bf16.mxu0 0
      %903 = vmatpush1.bf16.msra.mxu0 0
      %904 = vmatprep.subr.bf16.mxu0 0
      %905 = vmatpush1.bf16.msra.mxu0 0
      %906 = vmatprep.subr.bf16.mxu0 0
      %907 = vmatpush1.bf16.msra.mxu0 0
      %908 = vmatprep.subr.bf16.mxu0 0
      %909 = vmatpush1.bf16.msra.mxu0 0
      %910 = vmatprep.subr.bf16.mxu0 0
      %911 = vmatpush1.bf16.msra.mxu0 0
      %912 = vmatprep.subr.bf16.mxu0 0
      %913 = vmatpush1.bf16.msra.mxu0 0
      %914 = vmatprep.subr.bf16.mxu0 0
      %915 = vmatpush1.bf16.msra.mxu0 0
      %916 = vmatprep.subr.bf16.mxu0 0
      %917 = vmatpush1.bf16.msra.mxu0 0
      %918 = vmatprep.mubr.bf16.mxu0 0
      %919 = vmatmul.mubr.bf16.gmra.mrb[0].mxu0 %v814
      %v920 = vpop.f32.mrb[0].mxu0
      %v921 = vadd.f32 %v836, %v920
      %v922 = vpop.f32.mrb[0].mxu0
      %v923 = vpop.f32.mrb[0].mxu0
      %v924 = vadd.f32 %v836, %v923
      %v925 = vpop.f32.mrb[0].mxu0
      %926 = vdwg.mxu0
      %927 = vst [vmem:[#allocation9] sm:$0xff] %v921
      %928 = vst [vmem:[#allocation9 + $0x8] sm:$0xff] %v924
    $region41: #{tpu_custom_call.1} parent=1 // pred_fallthru
      _
    // Predicated region
    $region42: #{tpu_custom_call.1} parent=1 // pred_check
      _
    $region43: #{tpu_custom_call.1} parent=1 // pred_check_branch
      %930 = sbr.rel (0) target = $region45
    $region44: #{tpu_custom_call.1} parent=1 // pred_region
      %s932 = ssub.s32 256, 256
      %933 = vsyncadd [#allocation5], %s932
      %s934 = sshll.u32 [#allocation9], 4
      %s935 = int_to_ptr.vmem [resolvable:$true] %s934
      %940 = dma.vmem_to_hbm [thread:$0]  %s935, 256, %s5, [#allocation5], 128, 128, 8
    $region45: #{tpu_custom_call.1} parent=1 // pred_fallthru
      _
    // Predicated region
    $region46: #{tpu_custom_call.1} parent=1 // pred_check
      _
    $region47: #{tpu_custom_call.1} parent=1 // pred_check_branch
      %942 = sbr.rel (0) target = $region49
    $region48: #{tpu_custom_call.1} parent=1 // pred_region
      %943 = dma.done [#allocation5], 256
    $region49: #{tpu_custom_call.1} parent=1 // pred_fallthru
      _
    %944 = vsyncpa [#allocation4], 1
    %945 = vsyncpa [#allocation7], 1
    %946 = vsyncpa [#allocation5], 1

</llo_original>
